<compile_context>
chip_gen: v6e
topology: v6e:2x2x1
jax: 0.10.0
libtpu: 0.0.40
codegen_flags: <defaults>
</compile_context>

<pallas_src>
import functools

import jax
import jax.numpy as jnp
from jax import lax
from jax.experimental import pallas as pl
from jax.experimental.pallas import tpu as pltpu

BN_EPS = 1e-5
DP = 128        # node-state lane width == K of the fused message-MLP matmul
H1PAD = 128     # lane-dense hidden width of the fused heads
HEAD_PAD = 128  # lane-dense width of the fused heads output


# ------------------------------- the kernel -------------------------------

def _dospredict_kernel(dim1, n_layers,
                       x_ref, ea_ref, tgt_col_ref, srcn_col_ref, tgt_row_ref,
                       inv_deg_ref,
                       wp_ref, bp_ref,
                       w2a_ref, b2a_ref, a2a_ref,
                       wcs_ref, b1s_ref, gms_ref, bts_ref,
                       wh1_ref, bh1_ref, ah1_ref, wh2_ref, bh2_ref, ah2_ref,
                       a_pre_ref, a1s_ref,
                       o_ref):
    f32, bf16 = jnp.float32, jnp.bfloat16
    n = x_ref.shape[0]
    n_edge = ea_ref.shape[0]

    # ---- pre FC: out = PReLU(x @ Wp + bp); node state kept (N, 128) wide ----
    h = jnp.dot(x_ref[...].astype(bf16), wp_ref[...],
                preferred_element_type=f32) + bp_ref[...]
    out = jnp.where(h > 0, h, a_pre_ref[0] * h)                   # (N, DP) f32

    # ---- masks, built once from the int32 index columns/rows ----
    # fused gather mask [g_tgt | g_src]: row e has ones at tgt[e] and src[e]+N
    tgt_col = tgt_col_ref[...]                                    # (E, 1)
    srcn_col = srcn_col_ref[...]                                  # (E, 1) = src+N
    iota_e2n = lax.broadcasted_iota(jnp.int32, (n_edge, 2 * n), 1)
    g_cat = jnp.where((iota_e2n == tgt_col) | (iota_e2n == srcn_col),
                      1.0, 0.0).astype(bf16)                      # (E, 2N)
    # scatter (mean-aggregation) mask: m_agg[v, e] = 1 iff tgt[e] == v
    iota_ne = lax.broadcasted_iota(jnp.int32, (n, n_edge), 0)
    m_agg = jnp.where(iota_ne == tgt_row_ref[...], 1.0, 0.0).astype(bf16)
    inv_deg = inv_deg_ref[...]                                    # (N, 1) f32

    # ---- hoisted edge MLP for ALL layers in one matmul: (E, L*DP) ----
    ea = ea_ref[...].astype(bf16)
    e_all = jnp.dot(ea, w2a_ref[...], preferred_element_type=f32) + b2a_ref[...]
    e_all = jnp.where(e_all > 0, e_all, a2a_ref[...] * e_all)

    # ---- GC blocks (statically unrolled; weights stacked along axis 0) ----
    for l in range(n_layers):
        e_h = e_all[:, l * DP:(l + 1) * DP]       # static 128-lane slab

        # fused gather: x_i lands in cols [0,D), x_j (rolled) in [D,2D) (or the
        # mirrored block), edge-MLP output already sits in [2D, 2D+De).
        r = jnp.concatenate(
            [out, pltpu.roll(out, shift=dim1, axis=1)], axis=0).astype(bf16)
        z_in = jnp.dot(g_cat, r, preferred_element_type=f32) + e_h  # (E, DP)

        z = jnp.dot(z_in.astype(bf16), wcs_ref[l],
                    preferred_element_type=f32) + b1s_ref[l]
        z = jnp.where(z > 0, z, a1s_ref[l] * z)                     # (E, DP)

        # mean aggregation over incoming edges (padded edges have all-zero
        # mask columns, so their nonzero z rows contribute nothing) + residual
        agg = jnp.dot(m_agg, z.astype(bf16),
                      preferred_element_type=f32) * inv_deg         # (N, DP)
        hres = agg + out

        # BatchNorm1d (training batch statistics), one-pass variance
        mean = jnp.mean(hres, axis=0, keepdims=True)
        var = jnp.maximum(
            jnp.mean(hres * hres, axis=0, keepdims=True) - mean * mean, 0.0)
        out = gms_ref[l] * ((hres - mean) * lax.rsqrt(var + BN_EPS)) + bts_ref[l]

    # ---- fused dos/scaling heads -> one lane-dense (N, 128) store ----
    h1 = jnp.dot(out.astype(bf16), wh1_ref[...],
                 preferred_element_type=f32) + bh1_ref[...]
    h1 = jnp.where(h1 > 0, h1, ah1_ref[...] * h1)                   # (N, H1PAD)
    y = jnp.dot(h1.astype(bf16), wh2_ref[...],
                preferred_element_type=f32) + bh2_ref[...]
    o_ref[...] = jnp.where(y > 0, y, ah2_ref[...] * y)


# ------------------------------ param packing ------------------------------

def init_params(key, num_features, edge_dim, dim1, dim2, output_dim, gc_count):
    """Torch-layout parameters (W stored as (in_dim, out_dim))."""
    keys = iter(jax.random.split(key, 128))

    def lin(in_d, out_d):
        w = jax.random.normal(next(keys), (in_d, out_d), jnp.float32) / jnp.sqrt(
            jnp.float32(in_d))
        b = 0.1 * jax.random.normal(next(keys), (1, out_d), jnp.float32)
        return w, b

    alpha = jnp.array([0.25], jnp.float32)  # torch.nn.PReLU() default

    params = {}
    wp, bp = lin(num_features, dim1)
    params["pre"] = (wp, bp, alpha)

    gcs = []
    for _ in range(gc_count):
        w2, b2 = lin(edge_dim, edge_dim)
        wi, _ = lin(dim1, dim1)
        wj, _ = lin(dim1, dim1)
        we, b1 = lin(edge_dim, dim1)
        gcs.append(dict(
            w2=w2, b2=b2, a2=alpha,
            wi=wi, wj=wj, we=we, b1=b1, a1=alpha,
            gamma=jnp.ones((1, dim1), jnp.float32),
            beta=jnp.zeros((1, dim1), jnp.float32),
        ))
    params["gc"] = gcs

    wd1, bd1 = lin(dim1, dim2)
    wd2, bd2 = lin(dim2, output_dim)
    params["dos1"] = (wd1, bd1, alpha)
    params["dos2"] = (wd2, bd2, alpha)

    ws1, bs1 = lin(dim1, dim2)
    ws2, bs2 = lin(dim2, 1)
    params["scal1"] = (ws1, bs1, alpha)
    params["scal2"] = (ws2, bs2)
    return params


def pack_params(params, num_features, edge_dim, dim1, dim2, output_dim):
    """One-time HBM-side packing/padding of weights into the kernel layout."""
    f32, bf16 = jnp.float32, jnp.bfloat16
    L = len(params["gc"])
    e_lo = 2 * dim1                      # column offset of the edge-MLP block

    assert 2 * dim1 + edge_dim <= DP, "message-MLP stack must fit in 128 lanes"
    assert 3 * dim1 + edge_dim <= DP, "mirrored Wj block must fit in 128 lanes"
    assert 2 * dim2 <= H1PAD and output_dim + 1 <= HEAD_PAD

    wp, bp, a_pre = params["pre"]
    wp_p = jnp.zeros((num_features, DP), f32).at[:, :dim1].set(wp).astype(bf16)
    bp_p = jnp.zeros((1, DP), f32).at[:, :dim1].set(bp)

    # hoisted edge MLP: every layer's mlp2 occupies its own 128-lane slab,
    # with the (edge_dim) block already placed at lane offset 2*dim1.
    w2a = jnp.zeros((edge_dim, L * DP), f32)
    b2a = jnp.zeros((1, L * DP), f32)
    a2a = jnp.zeros((1, L * DP), f32)
    wcs, b1s, gms, bts, a1s = [], [], [], [], []
    for l, gp in enumerate(params["gc"]):
        lo = l * DP + e_lo
        w2a = w2a.at[:, lo:lo + edge_dim].set(gp["w2"])
        b2a = b2a.at[:, lo:lo + edge_dim].set(gp["b2"])
        a2a = a2a.at[:, l * DP:(l + 1) * DP].set(gp["a2"][0])

        wc = jnp.zeros((DP, DP), f32)
        wc = wc.at[:dim1, :dim1].set(gp["wi"])                 # x_i block
        wc = wc.at[dim1:2 * dim1, :dim1].set(gp["wj"])         # x_j block (roll +D)
        wc = wc.at[DP - dim1:, :dim1].set(gp["wj"])            # mirrored x_j block
        wc = wc.at[e_lo:e_lo + edge_dim, :dim1].set(gp["we"])  # edge-MLP block
        wcs.append(wc.astype(bf16))
        b1s.append(jnp.zeros((1, DP), f32).at[:, :dim1].set(gp["b1"]))
        gms.append(jnp.ones((1, DP), f32).at[:, :dim1].set(gp["gamma"]))
        bts.append(jnp.zeros((1, DP), f32).at[:, :dim1].set(gp["beta"]))
        a1s.append(gp["a1"][0])

    wd1, bd1, ad1 = params["dos1"]
    wd2, bd2, ad2 = params["dos2"]
    ws1, bs1, as1 = params["scal1"]
    ws2, bs2 = params["scal2"]

    # fused heads, hidden padded to a full 128 lanes
    wh1 = (jnp.zeros((DP, H1PAD), f32)
           .at[:dim1, :dim2].set(wd1)
           .at[:dim1, dim2:2 * dim2].set(ws1)).astype(bf16)
    bh1 = (jnp.zeros((1, H1PAD), f32)
           .at[:, :dim2].set(bd1).at[:, dim2:2 * dim2].set(bs1))
    ah1 = (jnp.ones((1, H1PAD), f32)
           .at[:, :dim2].set(ad1[0]).at[:, dim2:2 * dim2].set(as1[0]))
    wh2 = (jnp.zeros((H1PAD, HEAD_PAD), f32)
           .at[:dim2, :output_dim].set(wd2)
           .at[dim2:2 * dim2, output_dim].set(ws2[:, 0])).astype(bf16)
    bh2 = (jnp.zeros((1, HEAD_PAD), f32)
           .at[:, :output_dim].set(bd2)
           .at[:, output_dim].set(bs2[0, 0]))
    # alpha = a_dos2 on dos columns, 1.0 (identity PReLU) on scaling / padding
    ah2 = jnp.ones((1, HEAD_PAD), f32).at[:, :output_dim].set(ad2[0])

    return dict(
        wp=wp_p, bp=bp_p,
        w2a=w2a.astype(bf16), b2a=b2a, a2a=a2a,
        wcs=jnp.stack(wcs), b1s=jnp.stack(b1s),
        gms=jnp.stack(gms), bts=jnp.stack(bts),
        wh1=wh1, bh1=bh1, ah1=ah1, wh2=wh2, bh2=bh2, ah2=ah2,
        a_pre=a_pre.astype(f32),
        a1s=jnp.stack(a1s).astype(f32),
        meta=dict(dim1=dim1, output_dim=output_dim, n_layers=L),
    )


# ------------------------------ model wrapper ------------------------------

def dospredict_forward(x, edge_index, edge_attr, packed):
    """Pallas-backed forward. Returns (dos_out, scaling) like DOSpredict.forward."""
    meta = packed["meta"]
    dim1, out_dim, n_layers = meta["dim1"], meta["output_dim"], meta["n_layers"]

    n = x.shape[0]
    e = edge_index.shape[1]
    e_pad = ((e + 7) // 8) * 8

    src = edge_index[0].astype(jnp.int32)
    tgt = edge_index[1].astype(jnp.int32)
    # padded edges get index -1 -> all-zero mask rows/columns (no contribution);
    # src is pre-offset by +N so it addresses the second half of the fused mask.
    tgt_p = jnp.full((e_pad,), -1, jnp.int32).at[:e].set(tgt)
    srcn_p = jnp.full((e_pad,), -1, jnp.int32).at[:e].set(src + n)
    ea_p = jnp.zeros((e_pad, edge_attr.shape[1]), jnp.float32).at[:e].set(edge_attr)

    # mean-aggregation degrees precomputed on the host/XLA side (cheap segment-sum)
    deg = jnp.zeros((n,), jnp.float32).at[tgt].add(1.0)
    inv_deg = (1.0 / jnp.maximum(deg, 1.0)).reshape(n, 1)

    tgt_col = tgt_p.reshape(e_pad, 1)
    srcn_col = srcn_p.reshape(e_pad, 1)
    tgt_row = tgt_p.reshape(1, e_pad)

    vmem = pl.BlockSpec(memory_space=pltpu.MemorySpace.VMEM)
    smem = pl.BlockSpec(memory_space=pltpu.MemorySpace.SMEM)

    y = pl.pallas_call(
        functools.partial(_dospredict_kernel, dim1, n_layers),
        out_shape=jax.ShapeDtypeStruct((n, HEAD_PAD), jnp.float32),
        in_specs=[vmem] * 21 + [smem] * 2,
        out_specs=vmem,
        compiler_params=pltpu.CompilerParams(
            vmem_limit_bytes=48 * 1024 * 1024),
    )(x, ea_p, tgt_col, srcn_col, tgt_row, inv_deg,
      packed["wp"], packed["bp"],
      packed["w2a"], packed["b2a"], packed["a2a"],
      packed["wcs"], packed["b1s"], packed["gms"], packed["bts"],
      packed["wh1"], packed["bh1"], packed["ah1"],
      packed["wh2"], packed["bh2"], packed["ah2"],
      packed["a_pre"], packed["a1s"])

    dos = y[:, :out_dim]
    scal = y[:, out_dim]
    if out_dim == 1:
        return dos.reshape(-1), scal
    return dos, scal


# ----------------------------- pure-JAX reference -----------------------------

def reference_forward(x, edge_index, edge_attr, params, bf16_matmul=False):
    """Reference forward.  With bf16_matmul=True it mirrors the kernel's bf16
    operand quantization (f32 accumulation), giving a tight comparison target;
    with False it is the plain f32 semantics of the torch module."""
    f32 = jnp.float32
    if bf16_matmul:
        def mm(a, b):
            return jnp.dot(a.astype(jnp.bfloat16), b.astype(jnp.bfloat16),
                           preferred_element_type=f32)

        def q(a):
            return a.astype(jnp.bfloat16).astype(f32)
    else:
        def mm(a, b):
            return jnp.dot(a, b, preferred_element_type=f32)

        def q(a):
            return a

    def prelu(v, a):
        return jnp.where(v > 0, v, a * v)

    n = x.shape[0]
    src, tgt = edge_index[0], edge_index[1]

    wp, bp, ap = params["pre"]
    out = prelu(mm(x, wp) + bp, ap[0])

    deg = jnp.zeros((n,), f32).at[tgt].add(1.0)
    inv_deg = (1.0 / jnp.maximum(deg, 1.0))[:, None]

    for gp in params["gc"]:
        out_q = q(out)
        x_i, x_j = out_q[tgt], out_q[src]
        e_h = prelu(mm(edge_attr, gp["w2"]) + gp["b2"], gp["a2"][0])
        z = prelu(mm(x_i, gp["wi"]) + mm(x_j, gp["wj"]) + mm(e_h, gp["we"])
                  + gp["b1"], gp["a1"][0])
        agg = jnp.zeros_like(out).at[tgt].add(q(z)) * inv_deg
        h = agg + out
        mean = jnp.mean(h, axis=0, keepdims=True)
        var = jnp.mean((h - mean) ** 2, axis=0, keepdims=True)
        out = gp["gamma"] * ((h - mean) * lax.rsqrt(var + BN_EPS)) + gp["beta"]

    wd1, bd1, ad1 = params["dos1"]
    wd2, bd2, ad2 = params["dos2"]
    ws1, bs1, as1 = params["scal1"]
    ws2, bs2 = params["scal2"]
    dos = prelu(mm(prelu(mm(out, wd1) + bd1, ad1[0]), wd2) + bd2, ad2[0])
    scal = mm(prelu(mm(out, ws1) + bs1, as1[0]), ws2) + bs2

    if dos.shape[1] == 1:
        return dos.reshape(-1), scal.reshape(-1)
    return dos, scal.reshape(-1)


def _rel_err(a, b):
    return float(jnp.linalg.norm(a - b) / (jnp.linalg.norm(b) + 1e-12))


# ----------------------------------- main -----------------------------------

if __name__ == "__main__":
    N = 16            # nodes
    E = 48            # edges
    NUM_FEATURES = 8  # data.num_features
    EDGE_DIM = 4      # data.num_edge_features
    DIM1 = 32
    DIM2 = 32
    OUTPUT_DIM = 16   # len(data[0].y[0])
    GC_COUNT = 3

    key = jax.random.PRNGKey(0)
    kx, ke, ks, kt, kp = jax.random.split(key, 5)

    x = jax.random.normal(kx, (N, NUM_FEATURES), jnp.float32)
    edge_attr = jax.random.normal(ke, (E, EDGE_DIM), jnp.float32)
    src = jax.random.randint(ks, (E,), 0, N)
    tgt = jax.random.randint(kt, (E,), 0, N)
    edge_index = jnp.stack([src, tgt], axis=0)

    params = init_params(kp, NUM_FEATURES, EDGE_DIM, DIM1, DIM2,
                         OUTPUT_DIM, GC_COUNT)
    packed = pack_params(params, NUM_FEATURES, EDGE_DIM, DIM1, DIM2, OUTPUT_DIM)

    dos_out, scaling = dospredict_forward(x, edge_index, edge_attr, packed)
    dos_out = jax.block_until_ready(dos_out)
    scaling = jax.block_until_ready(scaling)

    assert dos_out.shape == (N, OUTPUT_DIM)
    assert scaling.shape == (N,)

    # Tight check vs. a reference that mirrors the kernel's bf16 operand quantization.
    dos_m, scal_m = reference_forward(x, edge_index, edge_attr, params,
                                      bf16_matmul=True)
    err_dos = _rel_err(dos_out, dos_m)
    err_scal = _rel_err(scaling, scal_m)
    assert err_dos < 5e-3, f"dos rel-norm error vs matched reference: {err_dos}"
    assert err_scal < 5e-3, f"scaling rel-norm error vs matched reference: {err_scal}"

    # Loose sanity check vs. the plain f32 (torch-equivalent) semantics.
    dos_f, scal_f = reference_forward(x, edge_index, edge_attr, params,
                                      bf16_matmul=False)
    assert jnp.allclose(dos_out, dos_f, atol=0.25, rtol=0.25), \
        f"dos mismatch vs f32 reference: {jnp.max(jnp.abs(dos_out - dos_f))}"
    assert jnp.allclose(scaling, scal_f, atol=0.25, rtol=0.25), \
        f"scaling mismatch vs f32 reference: {jnp.max(jnp.abs(scaling - scal_f))}"

    print("KERNEL_OK")
</pallas_src>

<mosaic_0001>
module attributes {stable_mosaic.version = 11 : i64} {
  func.func @_dospredict_kernel(%arg0: memref<16x8xf32, #tpu.memory_space<vmem>>, %arg1: memref<48x4xf32, #tpu.memory_space<vmem>>, %arg2: memref<48x1xi32, #tpu.memory_space<vmem>>, %arg3: memref<48x1xi32, #tpu.memory_space<vmem>>, %arg4: memref<1x48xi32, #tpu.memory_space<vmem>>, %arg5: memref<16x1xf32, #tpu.memory_space<vmem>>, %arg6: memref<8x128xbf16, #tpu.memory_space<vmem>>, %arg7: memref<1x128xf32, #tpu.memory_space<vmem>>, %arg8: memref<4x384xbf16, #tpu.memory_space<vmem>>, %arg9: memref<1x384xf32, #tpu.memory_space<vmem>>, %arg10: memref<1x384xf32, #tpu.memory_space<vmem>>, %arg11: memref<3x128x128xbf16, #tpu.memory_space<vmem>>, %arg12: memref<3x1x128xf32, #tpu.memory_space<vmem>>, %arg13: memref<3x1x128xf32, #tpu.memory_space<vmem>>, %arg14: memref<3x1x128xf32, #tpu.memory_space<vmem>>, %arg15: memref<128x128xbf16, #tpu.memory_space<vmem>>, %arg16: memref<1x128xf32, #tpu.memory_space<vmem>>, %arg17: memref<1x128xf32, #tpu.memory_space<vmem>>, %arg18: memref<128x128xbf16, #tpu.memory_space<vmem>>, %arg19: memref<1x128xf32, #tpu.memory_space<vmem>>, %arg20: memref<1x128xf32, #tpu.memory_space<vmem>>, %arg21: memref<1xf32, #tpu.memory_space<smem>>, %arg22: memref<3xf32, #tpu.memory_space<smem>>, %arg23: memref<16x128xf32, #tpu.memory_space<vmem>>) attributes {dimension_semantics = [], scalar_prefetch = 0 : i64, scratch_operands = 0 : i64, tpu.core_type = #tpu.core_type<tc>} {
    %c0 = arith.constant 0 : index
    %c0_0 = arith.constant 0 : index
    %0 = vector.load %arg0[%c0, %c0_0] : memref<16x8xf32, #tpu.memory_space<vmem>>, vector<16x8xf32>
    %1 = arith.truncf %0 : vector<16x8xf32> to vector<16x8xbf16>
    %c0_1 = arith.constant 0 : index
    %c0_2 = arith.constant 0 : index
    %2 = vector.load %arg6[%c0_1, %c0_2] : memref<8x128xbf16, #tpu.memory_space<vmem>>, vector<8x128xbf16>
    %cst = arith.constant dense<0.000000e+00> : vector<16x128xf32>
    %3 = tpu.matmul %1, %2, %cst {dimension_numbers = #tpu.dot_dimension_numbers<[1], [0], [0], [1], [0, 0, 1, 1], [], []>} : vector<16x8xbf16>, vector<8x128xbf16>, vector<16x128xf32> -> vector<16x128xf32>
    %c0_3 = arith.constant 0 : index
    %c0_4 = arith.constant 0 : index
    %4 = vector.load %arg7[%c0_3, %c0_4] : memref<1x128xf32, #tpu.memory_space<vmem>>, vector<1x128xf32>
    %5 = vector.broadcast %4 : vector<1x128xf32> to vector<16x128xf32>
    %6 = arith.addf %3, %5 : vector<16x128xf32>
    %cst_5 = arith.constant 0.000000e+00 : f32
    %7 = vector.broadcast %cst_5 : f32 to vector<16x128xf32>
    %8 = arith.cmpf ogt, %6, %7 : vector<16x128xf32>
    %c0_6 = arith.constant 0 : index
    %9 = memref.load %arg21[%c0_6] : memref<1xf32, #tpu.memory_space<smem>>
    %10 = vector.broadcast %9 : f32 to vector<16x128xf32>
    %11 = arith.mulf %10, %6 : vector<16x128xf32>
    %12 = arith.select %8, %6, %11 : vector<16x128xi1>, vector<16x128xf32>
    %c0_7 = arith.constant 0 : index
    %c0_8 = arith.constant 0 : index
    %13 = vector.load %arg2[%c0_7, %c0_8] : memref<48x1xi32, #tpu.memory_space<vmem>>, vector<48x1xi32>
    %c0_9 = arith.constant 0 : index
    %c0_10 = arith.constant 0 : index
    %14 = vector.load %arg3[%c0_9, %c0_10] : memref<48x1xi32, #tpu.memory_space<vmem>>, vector<48x1xi32>
    %15 = tpu.iota {dimensions = array<i32: 1>} : vector<48x32xi32>
    %16 = vector.broadcast %13 : vector<48x1xi32> to vector<48x32xi32>
    %17 = arith.cmpi eq, %15, %16 : vector<48x32xi32>
    %18 = vector.broadcast %14 : vector<48x1xi32> to vector<48x32xi32>
    %19 = arith.cmpi eq, %15, %18 : vector<48x32xi32>
    %20 = arith.ori %17, %19 : vector<48x32xi1>
    %cst_11 = arith.constant 1.000000e+00 : f32
    %cst_12 = arith.constant 0.000000e+00 : f32
    %21 = vector.broadcast %cst_11 : f32 to vector<48x32xf32>
    %22 = vector.broadcast %cst_12 : f32 to vector<48x32xf32>
    %23 = arith.select %20, %21, %22 : vector<48x32xi1>, vector<48x32xf32>
    %24 = arith.truncf %23 : vector<48x32xf32> to vector<48x32xbf16>
    %25 = tpu.iota {dimensions = array<i32: 0>} : vector<16x48xi32>
    %c0_13 = arith.constant 0 : index
    %c0_14 = arith.constant 0 : index
    %26 = vector.load %arg4[%c0_13, %c0_14] : memref<1x48xi32, #tpu.memory_space<vmem>>, vector<1x48xi32>
    %27 = vector.broadcast %26 : vector<1x48xi32> to vector<16x48xi32>
    %28 = arith.cmpi eq, %25, %27 : vector<16x48xi32>
    %cst_15 = arith.constant 1.000000e+00 : f32
    %cst_16 = arith.constant 0.000000e+00 : f32
    %29 = vector.broadcast %cst_15 : f32 to vector<16x48xf32>
    %30 = vector.broadcast %cst_16 : f32 to vector<16x48xf32>
    %31 = arith.select %28, %29, %30 : vector<16x48xi1>, vector<16x48xf32>
    %32 = arith.truncf %31 : vector<16x48xf32> to vector<16x48xbf16>
    %c0_17 = arith.constant 0 : index
    %c0_18 = arith.constant 0 : index
    %33 = vector.load %arg5[%c0_17, %c0_18] : memref<16x1xf32, #tpu.memory_space<vmem>>, vector<16x1xf32>
    %c0_19 = arith.constant 0 : index
    %c0_20 = arith.constant 0 : index
    %34 = vector.load %arg1[%c0_19, %c0_20] : memref<48x4xf32, #tpu.memory_space<vmem>>, vector<48x4xf32>
    %35 = arith.truncf %34 : vector<48x4xf32> to vector<48x4xbf16>
    %c0_21 = arith.constant 0 : index
    %c0_22 = arith.constant 0 : index
    %36 = vector.load %arg8[%c0_21, %c0_22] : memref<4x384xbf16, #tpu.memory_space<vmem>>, vector<4x384xbf16>
    %cst_23 = arith.constant dense<0.000000e+00> : vector<48x384xf32>
    %37 = tpu.matmul %35, %36, %cst_23 {dimension_numbers = #tpu.dot_dimension_numbers<[1], [0], [0], [1], [0, 0, 1, 1], [], []>} : vector<48x4xbf16>, vector<4x384xbf16>, vector<48x384xf32> -> vector<48x384xf32>
    %c0_24 = arith.constant 0 : index
    %c0_25 = arith.constant 0 : index
    %38 = vector.load %arg9[%c0_24, %c0_25] : memref<1x384xf32, #tpu.memory_space<vmem>>, vector<1x384xf32>
    %39 = vector.broadcast %38 : vector<1x384xf32> to vector<48x384xf32>
    %40 = arith.addf %37, %39 : vector<48x384xf32>
    %cst_26 = arith.constant 0.000000e+00 : f32
    %41 = vector.broadcast %cst_26 : f32 to vector<48x384xf32>
    %42 = arith.cmpf ogt, %40, %41 : vector<48x384xf32>
    %c0_27 = arith.constant 0 : index
    %c0_28 = arith.constant 0 : index
    %43 = vector.load %arg10[%c0_27, %c0_28] : memref<1x384xf32, #tpu.memory_space<vmem>>, vector<1x384xf32>
    %44 = vector.broadcast %43 : vector<1x384xf32> to vector<48x384xf32>
    %45 = arith.mulf %44, %40 : vector<48x384xf32>
    %46 = arith.select %42, %40, %45 : vector<48x384xi1>, vector<48x384xf32>
    %47 = vector.extract_strided_slice %46 {offsets = [0, 0], sizes = [48, 128], strides = [1, 1]} : vector<48x384xf32> to vector<48x128xf32>
    %c32_i32 = arith.constant 32 : i32
    %48 = tpu.dynamic_rotate %12 by %c32_i32 dim 1 : vector<16x128xf32>, i32 -> vector<16x128xf32>
    %49 = tpu.concatenate %12, %48 in 0 : vector<16x128xf32>, vector<16x128xf32> -> vector<32x128xf32>
    %50 = arith.truncf %49 : vector<32x128xf32> to vector<32x128xbf16>
    %cst_29 = arith.constant dense<0.000000e+00> : vector<48x128xf32>
    %51 = tpu.matmul %24, %50, %cst_29 {dimension_numbers = #tpu.dot_dimension_numbers<[1], [0], [0], [1], [0, 0, 1, 1], [], []>} : vector<48x32xbf16>, vector<32x128xbf16>, vector<48x128xf32> -> vector<48x128xf32>
    %52 = arith.addf %51, %47 : vector<48x128xf32>
    %53 = arith.truncf %52 : vector<48x128xf32> to vector<48x128xbf16>
    %c0_30 = arith.constant 0 : index
    %c0_31 = arith.constant 0 : index
    %c0_32 = arith.constant 0 : index
    %54 = vector.load %arg11[%c0_30, %c0_31, %c0_32] : memref<3x128x128xbf16, #tpu.memory_space<vmem>>, vector<1x128x128xbf16>
    %55 = vector.shape_cast %54 : vector<1x128x128xbf16> to vector<128x128xbf16>
    %cst_33 = arith.constant dense<0.000000e+00> : vector<48x128xf32>
    %56 = tpu.matmul %53, %55, %cst_33 {dimension_numbers = #tpu.dot_dimension_numbers<[1], [0], [0], [1], [0, 0, 1, 1], [], []>} : vector<48x128xbf16>, vector<128x128xbf16>, vector<48x128xf32> -> vector<48x128xf32>
    %c0_34 = arith.constant 0 : index
    %c0_35 = arith.constant 0 : index
    %c0_36 = arith.constant 0 : index
    %57 = vector.load %arg12[%c0_34, %c0_35, %c0_36] : memref<3x1x128xf32, #tpu.memory_space<vmem>>, vector<1x1x128xf32>
    %58 = vector.shape_cast %57 : vector<1x1x128xf32> to vector<1x128xf32>
    %59 = vector.broadcast %58 : vector<1x128xf32> to vector<48x128xf32>
    %60 = arith.addf %56, %59 : vector<48x128xf32>
    %cst_37 = arith.constant 0.000000e+00 : f32
    %61 = vector.broadcast %cst_37 : f32 to vector<48x128xf32>
    %62 = arith.cmpf ogt, %60, %61 : vector<48x128xf32>
    %c0_38 = arith.constant 0 : index
    %63 = memref.load %arg22[%c0_38] : memref<3xf32, #tpu.memory_space<smem>>
    %64 = vector.broadcast %63 : f32 to vector<48x128xf32>
    %65 = arith.mulf %64, %60 : vector<48x128xf32>
    %66 = arith.select %62, %60, %65 : vector<48x128xi1>, vector<48x128xf32>
    %67 = arith.truncf %66 : vector<48x128xf32> to vector<48x128xbf16>
    %cst_39 = arith.constant dense<0.000000e+00> : vector<16x128xf32>
    %68 = tpu.matmul %32, %67, %cst_39 {dimension_numbers = #tpu.dot_dimension_numbers<[1], [0], [0], [1], [0, 0, 1, 1], [], []>} : vector<16x48xbf16>, vector<48x128xbf16>, vector<16x128xf32> -> vector<16x128xf32>
    %69 = vector.broadcast %33 : vector<16x1xf32> to vector<16x128xf32>
    %70 = arith.mulf %68, %69 : vector<16x128xf32>
    %71 = arith.addf %70, %12 : vector<16x128xf32>
    %cst_40 = arith.constant dense<0.000000e+00> : vector<128xf32>
    %72 = vector.multi_reduction <add>, %71, %cst_40 [0] : vector<16x128xf32> to vector<128xf32>
    %73 = vector.shape_cast %72 : vector<128xf32> to vector<1x128xf32>
    %cst_41 = arith.constant 1.600000e+01 : f32
    %74 = vector.broadcast %cst_41 : f32 to vector<1x128xf32>
    %75 = arith.divf %73, %74 : vector<1x128xf32>
    %76 = arith.mulf %71, %71 : vector<16x128xf32>
    %cst_42 = arith.constant dense<0.000000e+00> : vector<128xf32>
    %77 = vector.multi_reduction <add>, %76, %cst_42 [0] : vector<16x128xf32> to vector<128xf32>
    %78 = vector.shape_cast %77 : vector<128xf32> to vector<1x128xf32>
    %cst_43 = arith.constant 1.600000e+01 : f32
    %79 = vector.broadcast %cst_43 : f32 to vector<1x128xf32>
    %80 = arith.divf %78, %79 : vector<1x128xf32>
    %81 = arith.mulf %75, %75 : vector<1x128xf32>
    %82 = arith.subf %80, %81 : vector<1x128xf32>
    %cst_44 = arith.constant 0.000000e+00 : f32
    %83 = vector.broadcast %cst_44 : f32 to vector<1x128xf32>
    %84 = arith.maximumf %82, %83 : vector<1x128xf32>
    %c0_45 = arith.constant 0 : index
    %c0_46 = arith.constant 0 : index
    %c0_47 = arith.constant 0 : index
    %85 = vector.load %arg13[%c0_45, %c0_46, %c0_47] : memref<3x1x128xf32, #tpu.memory_space<vmem>>, vector<1x1x128xf32>
    %86 = vector.shape_cast %85 : vector<1x1x128xf32> to vector<1x128xf32>
    %87 = vector.broadcast %75 : vector<1x128xf32> to vector<16x128xf32>
    %88 = arith.subf %71, %87 : vector<16x128xf32>
    %cst_48 = arith.constant 9.99999974E-6 : f32
    %89 = vector.broadcast %cst_48 : f32 to vector<1x128xf32>
    %90 = arith.addf %84, %89 : vector<1x128xf32>
    %91 = math.rsqrt %90 : vector<1x128xf32>
    %92 = vector.broadcast %91 : vector<1x128xf32> to vector<16x128xf32>
    %93 = arith.mulf %88, %92 : vector<16x128xf32>
    %94 = vector.broadcast %86 : vector<1x128xf32> to vector<16x128xf32>
    %95 = arith.mulf %94, %93 : vector<16x128xf32>
    %c0_49 = arith.constant 0 : index
    %c0_50 = arith.constant 0 : index
    %c0_51 = arith.constant 0 : index
    %96 = vector.load %arg14[%c0_49, %c0_50, %c0_51] : memref<3x1x128xf32, #tpu.memory_space<vmem>>, vector<1x1x128xf32>
    %97 = vector.shape_cast %96 : vector<1x1x128xf32> to vector<1x128xf32>
    %98 = vector.broadcast %97 : vector<1x128xf32> to vector<16x128xf32>
    %99 = arith.addf %95, %98 : vector<16x128xf32>
    %100 = vector.extract_strided_slice %46 {offsets = [0, 128], sizes = [48, 128], strides = [1, 1]} : vector<48x384xf32> to vector<48x128xf32>
    %c32_i32_52 = arith.constant 32 : i32
    %101 = tpu.dynamic_rotate %99 by %c32_i32_52 dim 1 : vector<16x128xf32>, i32 -> vector<16x128xf32>
    %102 = tpu.concatenate %99, %101 in 0 : vector<16x128xf32>, vector<16x128xf32> -> vector<32x128xf32>
    %103 = arith.truncf %102 : vector<32x128xf32> to vector<32x128xbf16>
    %cst_53 = arith.constant dense<0.000000e+00> : vector<48x128xf32>
    %104 = tpu.matmul %24, %103, %cst_53 {dimension_numbers = #tpu.dot_dimension_numbers<[1], [0], [0], [1], [0, 0, 1, 1], [], []>} : vector<48x32xbf16>, vector<32x128xbf16>, vector<48x128xf32> -> vector<48x128xf32>
    %105 = arith.addf %104, %100 : vector<48x128xf32>
    %106 = arith.truncf %105 : vector<48x128xf32> to vector<48x128xbf16>
    %c1 = arith.constant 1 : index
    %c0_54 = arith.constant 0 : index
    %c0_55 = arith.constant 0 : index
    %107 = vector.load %arg11[%c1, %c0_54, %c0_55] : memref<3x128x128xbf16, #tpu.memory_space<vmem>>, vector<1x128x128xbf16>
    %108 = vector.shape_cast %107 : vector<1x128x128xbf16> to vector<128x128xbf16>
    %cst_56 = arith.constant dense<0.000000e+00> : vector<48x128xf32>
    %109 = tpu.matmul %106, %108, %cst_56 {dimension_numbers = #tpu.dot_dimension_numbers<[1], [0], [0], [1], [0, 0, 1, 1], [], []>} : vector<48x128xbf16>, vector<128x128xbf16>, vector<48x128xf32> -> vector<48x128xf32>
    %c1_57 = arith.constant 1 : index
    %c0_58 = arith.constant 0 : index
    %c0_59 = arith.constant 0 : index
    %110 = vector.load %arg12[%c1_57, %c0_58, %c0_59] : memref<3x1x128xf32, #tpu.memory_space<vmem>>, vector<1x1x128xf32>
    %111 = vector.shape_cast %110 : vector<1x1x128xf32> to vector<1x128xf32>
    %112 = vector.broadcast %111 : vector<1x128xf32> to vector<48x128xf32>
    %113 = arith.addf %109, %112 : vector<48x128xf32>
    %cst_60 = arith.constant 0.000000e+00 : f32
    %114 = vector.broadcast %cst_60 : f32 to vector<48x128xf32>
    %115 = arith.cmpf ogt, %113, %114 : vector<48x128xf32>
    %c1_61 = arith.constant 1 : index
    %116 = memref.load %arg22[%c1_61] : memref<3xf32, #tpu.memory_space<smem>>
    %117 = vector.broadcast %116 : f32 to vector<48x128xf32>
    %118 = arith.mulf %117, %113 : vector<48x128xf32>
    %119 = arith.select %115, %113, %118 : vector<48x128xi1>, vector<48x128xf32>
    %120 = arith.truncf %119 : vector<48x128xf32> to vector<48x128xbf16>
    %cst_62 = arith.constant dense<0.000000e+00> : vector<16x128xf32>
    %121 = tpu.matmul %32, %120, %cst_62 {dimension_numbers = #tpu.dot_dimension_numbers<[1], [0], [0], [1], [0, 0, 1, 1], [], []>} : vector<16x48xbf16>, vector<48x128xbf16>, vector<16x128xf32> -> vector<16x128xf32>
    %122 = vector.broadcast %33 : vector<16x1xf32> to vector<16x128xf32>
    %123 = arith.mulf %121, %122 : vector<16x128xf32>
    %124 = arith.addf %123, %99 : vector<16x128xf32>
    %cst_63 = arith.constant dense<0.000000e+00> : vector<128xf32>
    %125 = vector.multi_reduction <add>, %124, %cst_63 [0] : vector<16x128xf32> to vector<128xf32>
    %126 = vector.shape_cast %125 : vector<128xf32> to vector<1x128xf32>
    %cst_64 = arith.constant 1.600000e+01 : f32
    %127 = vector.broadcast %cst_64 : f32 to vector<1x128xf32>
    %128 = arith.divf %126, %127 : vector<1x128xf32>
    %129 = arith.mulf %124, %124 : vector<16x128xf32>
    %cst_65 = arith.constant dense<0.000000e+00> : vector<128xf32>
    %130 = vector.multi_reduction <add>, %129, %cst_65 [0] : vector<16x128xf32> to vector<128xf32>
    %131 = vector.shape_cast %130 : vector<128xf32> to vector<1x128xf32>
    %cst_66 = arith.constant 1.600000e+01 : f32
    %132 = vector.broadcast %cst_66 : f32 to vector<1x128xf32>
    %133 = arith.divf %131, %132 : vector<1x128xf32>
    %134 = arith.mulf %128, %128 : vector<1x128xf32>
    %135 = arith.subf %133, %134 : vector<1x128xf32>
    %cst_67 = arith.constant 0.000000e+00 : f32
    %136 = vector.broadcast %cst_67 : f32 to vector<1x128xf32>
    %137 = arith.maximumf %135, %136 : vector<1x128xf32>
    %c1_68 = arith.constant 1 : index
    %c0_69 = arith.constant 0 : index
    %c0_70 = arith.constant 0 : index
    %138 = vector.load %arg13[%c1_68, %c0_69, %c0_70] : memref<3x1x128xf32, #tpu.memory_space<vmem>>, vector<1x1x128xf32>
    %139 = vector.shape_cast %138 : vector<1x1x128xf32> to vector<1x128xf32>
    %140 = vector.broadcast %128 : vector<1x128xf32> to vector<16x128xf32>
    %141 = arith.subf %124, %140 : vector<16x128xf32>
    %cst_71 = arith.constant 9.99999974E-6 : f32
    %142 = vector.broadcast %cst_71 : f32 to vector<1x128xf32>
    %143 = arith.addf %137, %142 : vector<1x128xf32>
    %144 = math.rsqrt %143 : vector<1x128xf32>
    %145 = vector.broadcast %144 : vector<1x128xf32> to vector<16x128xf32>
    %146 = arith.mulf %141, %145 : vector<16x128xf32>
    %147 = vector.broadcast %139 : vector<1x128xf32> to vector<16x128xf32>
    %148 = arith.mulf %147, %146 : vector<16x128xf32>
    %c1_72 = arith.constant 1 : index
    %c0_73 = arith.constant 0 : index
    %c0_74 = arith.constant 0 : index
    %149 = vector.load %arg14[%c1_72, %c0_73, %c0_74] : memref<3x1x128xf32, #tpu.memory_space<vmem>>, vector<1x1x128xf32>
    %150 = vector.shape_cast %149 : vector<1x1x128xf32> to vector<1x128xf32>
    %151 = vector.broadcast %150 : vector<1x128xf32> to vector<16x128xf32>
    %152 = arith.addf %148, %151 : vector<16x128xf32>
    %153 = vector.extract_strided_slice %46 {offsets = [0, 256], sizes = [48, 128], strides = [1, 1]} : vector<48x384xf32> to vector<48x128xf32>
    %c32_i32_75 = arith.constant 32 : i32
    %154 = tpu.dynamic_rotate %152 by %c32_i32_75 dim 1 : vector<16x128xf32>, i32 -> vector<16x128xf32>
    %155 = tpu.concatenate %152, %154 in 0 : vector<16x128xf32>, vector<16x128xf32> -> vector<32x128xf32>
    %156 = arith.truncf %155 : vector<32x128xf32> to vector<32x128xbf16>
    %cst_76 = arith.constant dense<0.000000e+00> : vector<48x128xf32>
    %157 = tpu.matmul %24, %156, %cst_76 {dimension_numbers = #tpu.dot_dimension_numbers<[1], [0], [0], [1], [0, 0, 1, 1], [], []>} : vector<48x32xbf16>, vector<32x128xbf16>, vector<48x128xf32> -> vector<48x128xf32>
    %158 = arith.addf %157, %153 : vector<48x128xf32>
    %159 = arith.truncf %158 : vector<48x128xf32> to vector<48x128xbf16>
    %c2 = arith.constant 2 : index
    %c0_77 = arith.constant 0 : index
    %c0_78 = arith.constant 0 : index
    %160 = vector.load %arg11[%c2, %c0_77, %c0_78] : memref<3x128x128xbf16, #tpu.memory_space<vmem>>, vector<1x128x128xbf16>
    %161 = vector.shape_cast %160 : vector<1x128x128xbf16> to vector<128x128xbf16>
    %cst_79 = arith.constant dense<0.000000e+00> : vector<48x128xf32>
    %162 = tpu.matmul %159, %161, %cst_79 {dimension_numbers = #tpu.dot_dimension_numbers<[1], [0], [0], [1], [0, 0, 1, 1], [], []>} : vector<48x128xbf16>, vector<128x128xbf16>, vector<48x128xf32> -> vector<48x128xf32>
    %c2_80 = arith.constant 2 : index
    %c0_81 = arith.constant 0 : index
    %c0_82 = arith.constant 0 : index
    %163 = vector.load %arg12[%c2_80, %c0_81, %c0_82] : memref<3x1x128xf32, #tpu.memory_space<vmem>>, vector<1x1x128xf32>
    %164 = vector.shape_cast %163 : vector<1x1x128xf32> to vector<1x128xf32>
    %165 = vector.broadcast %164 : vector<1x128xf32> to vector<48x128xf32>
    %166 = arith.addf %162, %165 : vector<48x128xf32>
    %cst_83 = arith.constant 0.000000e+00 : f32
    %167 = vector.broadcast %cst_83 : f32 to vector<48x128xf32>
    %168 = arith.cmpf ogt, %166, %167 : vector<48x128xf32>
    %c2_84 = arith.constant 2 : index
    %169 = memref.load %arg22[%c2_84] : memref<3xf32, #tpu.memory_space<smem>>
    %170 = vector.broadcast %169 : f32 to vector<48x128xf32>
    %171 = arith.mulf %170, %166 : vector<48x128xf32>
    %172 = arith.select %168, %166, %171 : vector<48x128xi1>, vector<48x128xf32>
    %173 = arith.truncf %172 : vector<48x128xf32> to vector<48x128xbf16>
    %cst_85 = arith.constant dense<0.000000e+00> : vector<16x128xf32>
    %174 = tpu.matmul %32, %173, %cst_85 {dimension_numbers = #tpu.dot_dimension_numbers<[1], [0], [0], [1], [0, 0, 1, 1], [], []>} : vector<16x48xbf16>, vector<48x128xbf16>, vector<16x128xf32> -> vector<16x128xf32>
    %175 = vector.broadcast %33 : vector<16x1xf32> to vector<16x128xf32>
    %176 = arith.mulf %174, %175 : vector<16x128xf32>
    %177 = arith.addf %176, %152 : vector<16x128xf32>
    %cst_86 = arith.constant dense<0.000000e+00> : vector<128xf32>
    %178 = vector.multi_reduction <add>, %177, %cst_86 [0] : vector<16x128xf32> to vector<128xf32>
    %179 = vector.shape_cast %178 : vector<128xf32> to vector<1x128xf32>
    %cst_87 = arith.constant 1.600000e+01 : f32
    %180 = vector.broadcast %cst_87 : f32 to vector<1x128xf32>
    %181 = arith.divf %179, %180 : vector<1x128xf32>
    %182 = arith.mulf %177, %177 : vector<16x128xf32>
    %cst_88 = arith.constant dense<0.000000e+00> : vector<128xf32>
    %183 = vector.multi_reduction <add>, %182, %cst_88 [0] : vector<16x128xf32> to vector<128xf32>
    %184 = vector.shape_cast %183 : vector<128xf32> to vector<1x128xf32>
    %cst_89 = arith.constant 1.600000e+01 : f32
    %185 = vector.broadcast %cst_89 : f32 to vector<1x128xf32>
    %186 = arith.divf %184, %185 : vector<1x128xf32>
    %187 = arith.mulf %181, %181 : vector<1x128xf32>
    %188 = arith.subf %186, %187 : vector<1x128xf32>
    %cst_90 = arith.constant 0.000000e+00 : f32
    %189 = vector.broadcast %cst_90 : f32 to vector<1x128xf32>
    %190 = arith.maximumf %188, %189 : vector<1x128xf32>
    %c2_91 = arith.constant 2 : index
    %c0_92 = arith.constant 0 : index
    %c0_93 = arith.constant 0 : index
    %191 = vector.load %arg13[%c2_91, %c0_92, %c0_93] : memref<3x1x128xf32, #tpu.memory_space<vmem>>, vector<1x1x128xf32>
    %192 = vector.shape_cast %191 : vector<1x1x128xf32> to vector<1x128xf32>
    %193 = vector.broadcast %181 : vector<1x128xf32> to vector<16x128xf32>
    %194 = arith.subf %177, %193 : vector<16x128xf32>
    %cst_94 = arith.constant 9.99999974E-6 : f32
    %195 = vector.broadcast %cst_94 : f32 to vector<1x128xf32>
    %196 = arith.addf %190, %195 : vector<1x128xf32>
    %197 = math.rsqrt %196 : vector<1x128xf32>
    %198 = vector.broadcast %197 : vector<1x128xf32> to vector<16x128xf32>
    %199 = arith.mulf %194, %198 : vector<16x128xf32>
    %200 = vector.broadcast %192 : vector<1x128xf32> to vector<16x128xf32>
    %201 = arith.mulf %200, %199 : vector<16x128xf32>
    %c2_95 = arith.constant 2 : index
    %c0_96 = arith.constant 0 : index
    %c0_97 = arith.constant 0 : index
    %202 = vector.load %arg14[%c2_95, %c0_96, %c0_97] : memref<3x1x128xf32, #tpu.memory_space<vmem>>, vector<1x1x128xf32>
    %203 = vector.shape_cast %202 : vector<1x1x128xf32> to vector<1x128xf32>
    %204 = vector.broadcast %203 : vector<1x128xf32> to vector<16x128xf32>
    %205 = arith.addf %201, %204 : vector<16x128xf32>
    %206 = arith.truncf %205 : vector<16x128xf32> to vector<16x128xbf16>
    %c0_98 = arith.constant 0 : index
    %c0_99 = arith.constant 0 : index
    %207 = vector.load %arg15[%c0_98, %c0_99] : memref<128x128xbf16, #tpu.memory_space<vmem>>, vector<128x128xbf16>
    %cst_100 = arith.constant dense<0.000000e+00> : vector<16x128xf32>
    %208 = tpu.matmul %206, %207, %cst_100 {dimension_numbers = #tpu.dot_dimension_numbers<[1], [0], [0], [1], [0, 0, 1, 1], [], []>} : vector<16x128xbf16>, vector<128x128xbf16>, vector<16x128xf32> -> vector<16x128xf32>
    %c0_101 = arith.constant 0 : index
    %c0_102 = arith.constant 0 : index
    %209 = vector.load %arg16[%c0_101, %c0_102] : memref<1x128xf32, #tpu.memory_space<vmem>>, vector<1x128xf32>
    %210 = vector.broadcast %209 : vector<1x128xf32> to vector<16x128xf32>
    %211 = arith.addf %208, %210 : vector<16x128xf32>
    %cst_103 = arith.constant 0.000000e+00 : f32
    %212 = vector.broadcast %cst_103 : f32 to vector<16x128xf32>
    %213 = arith.cmpf ogt, %211, %212 : vector<16x128xf32>
    %c0_104 = arith.constant 0 : index
    %c0_105 = arith.constant 0 : index
    %214 = vector.load %arg17[%c0_104, %c0_105] : memref<1x128xf32, #tpu.memory_space<vmem>>, vector<1x128xf32>
    %215 = vector.broadcast %214 : vector<1x128xf32> to vector<16x128xf32>
    %216 = arith.mulf %215, %211 : vector<16x128xf32>
    %217 = arith.select %213, %211, %216 : vector<16x128xi1>, vector<16x128xf32>
    %218 = arith.truncf %217 : vector<16x128xf32> to vector<16x128xbf16>
    %c0_106 = arith.constant 0 : index
    %c0_107 = arith.constant 0 : index
    %219 = vector.load %arg18[%c0_106, %c0_107] : memref<128x128xbf16, #tpu.memory_space<vmem>>, vector<128x128xbf16>
    %cst_108 = arith.constant dense<0.000000e+00> : vector<16x128xf32>
    %220 = tpu.matmul %218, %219, %cst_108 {dimension_numbers = #tpu.dot_dimension_numbers<[1], [0], [0], [1], [0, 0, 1, 1], [], []>} : vector<16x128xbf16>, vector<128x128xbf16>, vector<16x128xf32> -> vector<16x128xf32>
    %c0_109 = arith.constant 0 : index
    %c0_110 = arith.constant 0 : index
    %221 = vector.load %arg19[%c0_109, %c0_110] : memref<1x128xf32, #tpu.memory_space<vmem>>, vector<1x128xf32>
    %222 = vector.broadcast %221 : vector<1x128xf32> to vector<16x128xf32>
    %223 = arith.addf %220, %222 : vector<16x128xf32>
    %cst_111 = arith.constant 0.000000e+00 : f32
    %224 = vector.broadcast %cst_111 : f32 to vector<16x128xf32>
    %225 = arith.cmpf ogt, %223, %224 : vector<16x128xf32>
    %c0_112 = arith.constant 0 : index
    %c0_113 = arith.constant 0 : index
    %226 = vector.load %arg20[%c0_112, %c0_113] : memref<1x128xf32, #tpu.memory_space<vmem>>, vector<1x128xf32>
    %227 = vector.broadcast %226 : vector<1x128xf32> to vector<16x128xf32>
    %228 = arith.mulf %227, %223 : vector<16x128xf32>
    %229 = arith.select %225, %223, %228 : vector<16x128xi1>, vector<16x128xf32>
    %c0_114 = arith.constant 0 : index
    %c0_115 = arith.constant 0 : index
    %230 = vector.load %arg23[%c0_114, %c0_115] : memref<16x128xf32, #tpu.memory_space<vmem>>, vector<16x128xf32>
    tpu.vector_store %arg23[%c0_114, %c0_115], %229 {strides = array<i32>} : memref<16x128xf32, #tpu.memory_space<vmem>>, vector<16x128xf32>,
    return
  }
}

</mosaic_0001>

<llo_original>
// kernel: tpu_custom_call.1
$region0: #{tpu_custom_call.1}
  #allocation0 [shape = 'u32[]', space=smem, size = 0x4, offset = 0x4, fixed_abs, tag = 'smem constant byte address 0x4 - core index']
  #allocation1 [shape = 'u32[144,128]{1,0:T(1,128)}', space=vmem, size = 0x12000, scoped, tag = 'internal scratch']
  #allocation2 [shape = 'f32[1]{0:T(128)S(6)}', space=smem, size = 0x200, scoped, tag = 'scoped memory for tpu_custom_call.1']
  %s0 = inlined_call_operand.vmem [shape: f32[16,8], index: 0, kind: input, shape index: {}]
  %s1 = inlined_call_operand.vmem [shape: f32[48,4], index: 1, kind: input, shape index: {}]
  %s2 = inlined_call_operand.vmem [shape: s32[48,1], index: 2, kind: input, shape index: {}]
  %s3 = inlined_call_operand.vmem [shape: s32[48,1], index: 3, kind: input, shape index: {}]
  %s4 = inlined_call_operand.vmem [shape: s32[1,48], index: 4, kind: input, shape index: {}]
  %s5 = inlined_call_operand.vmem [shape: f32[16,1], index: 5, kind: input, shape index: {}]
  %s6 = inlined_call_operand.vmem [shape: bf16[8,128], index: 6, kind: input, shape index: {}]
  %s7 = inlined_call_operand.vmem [shape: f32[1,128], index: 7, kind: input, shape index: {}]
  %s8 = inlined_call_operand.vmem [shape: bf16[4,384], index: 8, kind: input, shape index: {}]
  %s9 = inlined_call_operand.vmem [shape: f32[1,384], index: 9, kind: input, shape index: {}]
  %s10 = inlined_call_operand.vmem [shape: f32[1,384], index: 10, kind: input, shape index: {}]
  %s11 = inlined_call_operand.vmem [shape: bf16[3,128,128], index: 11, kind: input, shape index: {}]
  %s12 = inlined_call_operand.vmem [shape: f32[3,1,128], index: 12, kind: input, shape index: {}]
  %s13 = inlined_call_operand.vmem [shape: f32[3,1,128], index: 13, kind: input, shape index: {}]
  %s14 = inlined_call_operand.hbm [shape: f32[3,1,128], index: 14, kind: input, shape index: {}]
  %s15 = inlined_call_operand.hbm [shape: bf16[128,128], index: 15, kind: input, shape index: {}]
  %s16 = inlined_call_operand.vmem [shape: f32[1,128], index: 16, kind: input, shape index: {}]
  %s17 = inlined_call_operand.vmem [shape: f32[1,128], index: 17, kind: input, shape index: {}]
  %s18 = inlined_call_operand.hbm [shape: bf16[128,128], index: 18, kind: input, shape index: {}]
  %s19 = inlined_call_operand.vmem [shape: f32[1,128], index: 19, kind: input, shape index: {}]
  %s20 = inlined_call_operand.vmem [shape: f32[1,128], index: 20, kind: input, shape index: {}]
  %s21 = inlined_call_operand.<no memory space> [shape: f32[1], index: 21, kind: input, shape index: {}]
  %s22 = inlined_call_operand.vmem [shape: f32[3], index: 22, kind: input, shape index: {}]
  %s23 = inlined_call_operand.hbm [shape: f32[16,128], index: 23, kind: output, shape index: {}]
  %s24 = sld [smem:[#allocation0]]
  $region118: #{tpu_custom_call.1} parent=0
    _
  %s26 = ssub.s32 1, %s24
  %s27 = scalar_select 0, %s26, %s24
  %28 = sst [smem:[#allocation2]] %s21
  $region1: #{tpu_custom_call.1} parent=0
    #allocation3 [shape = 'u8[1536]{0}', space=vmem, size = 0x800, scoped, tag = 'input window, operand 14, single buffered']
    #allocation4 [shape = 's32[1]{0}', space=sflag, size = 0x4, scoped, tag = 'scoped memory for tpu_custom_call.1']
    #allocation5 [shape = 's32[1]{0}', space=sflag, size = 0x4, scoped, tag = 'scoped memory for tpu_custom_call.1']
    #allocation6 [shape = 's32[1]{0}', space=sflag, size = 0x4, scoped, tag = 'scoped memory for tpu_custom_call.1']
    #allocation7 [shape = 'u8[32768]{0}', space=vmem, size = 0x8000, scoped, tag = 'input window, operand 15, single buffered']
    #allocation8 [shape = 's32[1]{0}', space=sflag, size = 0x4, scoped, tag = 'scoped memory for tpu_custom_call.1']
    #allocation9 [shape = 'u8[32768]{0}', space=vmem, size = 0x8000, scoped, tag = 'input window, operand 18, single buffered']
    #allocation10 [shape = 'u8[512]{0}', space=smem, size = 0x200, scoped, tag = 'input window, operand 22, single buffered']
    #allocation11 [shape = 'u8[8192]{0}', space=vmem, size = 0x2000, scoped, tag = 'output window, operand 0, single buffered']
    %29 = vsyncpa [#allocation4], 0
    %30 = vsyncpa [#allocation8], 0
    %31 = vsyncpa [#allocation6], 0
    %32 = vsyncpa [#allocation5], 0
    // Predicated region
    $region2: #{tpu_custom_call.1} parent=1 // pred_check
      _
    $region3: #{tpu_custom_call.1} parent=1 // pred_check_branch
      %34 = sbr.rel (0) target = $region5
    $region4: #{tpu_custom_call.1} parent=1 // pred_region
      _
    $region5: #{tpu_custom_call.1} parent=1 // pred_fallthru
      _
    // Predicated region
    $region6: #{tpu_custom_call.1} parent=1 // pred_check
      _
    $region7: #{tpu_custom_call.1} parent=1 // pred_check_branch
      %36 = sbr.rel (0) target = $region9
    $region8: #{tpu_custom_call.1} parent=1 // pred_region
      _
    $region9: #{tpu_custom_call.1} parent=1 // pred_fallthru
      _
    // Predicated region
    $region10: #{tpu_custom_call.1} parent=1 // pred_check
      _
    $region11: #{tpu_custom_call.1} parent=1 // pred_check_branch
      %38 = sbr.rel (0) target = $region13
    $region12: #{tpu_custom_call.1} parent=1 // pred_region
      _
    $region13: #{tpu_custom_call.1} parent=1 // pred_fallthru
      _
    // Predicated region
    $region14: #{tpu_custom_call.1} parent=1 // pred_check
      _
    $region15: #{tpu_custom_call.1} parent=1 // pred_check_branch
      %40 = sbr.rel (0) target = $region17
    $region16: #{tpu_custom_call.1} parent=1 // pred_region
      _
    $region17: #{tpu_custom_call.1} parent=1 // pred_fallthru
      _
    // Predicated region
    $region18: #{tpu_custom_call.1} parent=1 // pred_check
      _
    $region19: #{tpu_custom_call.1} parent=1 // pred_check_branch
      %42 = sbr.rel (0) target = $region21
    $region20: #{tpu_custom_call.1} parent=1 // pred_region
      _
    $region21: #{tpu_custom_call.1} parent=1 // pred_fallthru
      _
    // Predicated region
    $region22: #{tpu_custom_call.1} parent=1 // pred_check
      _
    $region23: #{tpu_custom_call.1} parent=1 // pred_check_branch
      %44 = sbr.rel (0) target = $region25
    $region24: #{tpu_custom_call.1} parent=1 // pred_region
      _
    $region25: #{tpu_custom_call.1} parent=1 // pred_fallthru
      _
    // Predicated region
    $region26: #{tpu_custom_call.1} parent=1 // pred_check
      _
    $region27: #{tpu_custom_call.1} parent=1 // pred_check_branch
      %46 = sbr.rel (0) target = $region29
    $region28: #{tpu_custom_call.1} parent=1 // pred_region
      _
    $region29: #{tpu_custom_call.1} parent=1 // pred_fallthru
      _
    // Predicated region
    $region30: #{tpu_custom_call.1} parent=1 // pred_check
      _
    $region31: #{tpu_custom_call.1} parent=1 // pred_check_branch
      %48 = sbr.rel (0) target = $region33
    $region32: #{tpu_custom_call.1} parent=1 // pred_region
      _
    $region33: #{tpu_custom_call.1} parent=1 // pred_fallthru
      _
    // Predicated region
    $region34: #{tpu_custom_call.1} parent=1 // pred_check
      _
    $region35: #{tpu_custom_call.1} parent=1 // pred_check_branch
      %50 = sbr.rel (0) target = $region37
    $region36: #{tpu_custom_call.1} parent=1 // pred_region
      _
    $region37: #{tpu_custom_call.1} parent=1 // pred_fallthru
      _
    // Predicated region
    $region38: #{tpu_custom_call.1} parent=1 // pred_check
      _
    $region39: #{tpu_custom_call.1} parent=1 // pred_check_branch
      %52 = sbr.rel (0) target = $region41
    $region40: #{tpu_custom_call.1} parent=1 // pred_region
      _
    $region41: #{tpu_custom_call.1} parent=1 // pred_fallthru
      _
    // Predicated region
    $region42: #{tpu_custom_call.1} parent=1 // pred_check
      _
    $region43: #{tpu_custom_call.1} parent=1 // pred_check_branch
      %54 = sbr.rel (0) target = $region45
    $region44: #{tpu_custom_call.1} parent=1 // pred_region
      _
    $region45: #{tpu_custom_call.1} parent=1 // pred_fallthru
      _
    // Predicated region
    $region46: #{tpu_custom_call.1} parent=1 // pred_check
      _
    $region47: #{tpu_custom_call.1} parent=1 // pred_check_branch
      %56 = sbr.rel (0) target = $region49
    $region48: #{tpu_custom_call.1} parent=1 // pred_region
      _
    $region49: #{tpu_custom_call.1} parent=1 // pred_fallthru
      _
    // Predicated region
    $region50: #{tpu_custom_call.1} parent=1 // pred_check
      _
    $region51: #{tpu_custom_call.1} parent=1 // pred_check_branch
      %58 = sbr.rel (0) target = $region53
    $region52: #{tpu_custom_call.1} parent=1 // pred_region
      _
    $region53: #{tpu_custom_call.1} parent=1 // pred_fallthru
      _
    // Predicated region
    $region54: #{tpu_custom_call.1} parent=1 // pred_check
      _
    $region55: #{tpu_custom_call.1} parent=1 // pred_check_branch
      %60 = sbr.rel (0) target = $region57
    $region56: #{tpu_custom_call.1} parent=1 // pred_region
      _
    $region57: #{tpu_custom_call.1} parent=1 // pred_fallthru
      _
    // Predicated region
    $region58: #{tpu_custom_call.1} parent=1 // pred_check
      _
    $region59: #{tpu_custom_call.1} parent=1 // pred_check_branch
      %62 = sbr.rel (0) target = $region61
    $region60: #{tpu_custom_call.1} parent=1 // pred_region
      %s64 = ssub.s32 48, 48
      %65 = vsyncadd [#allocation4], %s64
      %s66 = sshll.u32 [#allocation3], 4
      %s67 = int_to_ptr.vmem [resolvable:$true] %s66
      %72 = dma.hbm_to_vmem [thread:$0]  %s14, 48, %s67, [#allocation4], 16, 16, 1
    $region61: #{tpu_custom_call.1} parent=1 // pred_fallthru
      _
    // Predicated region
    $region62: #{tpu_custom_call.1} parent=1 // pred_check
      _
    $region63: #{tpu_custom_call.1} parent=1 // pred_check_branch
      %74 = sbr.rel (0) target = $region65
    $region64: #{tpu_custom_call.1} parent=1 // pred_region
      %s76 = ssub.s32 1024, 1024
      %77 = vsyncadd [#allocation8], %s76
      %s78 = sshll.u32 [#allocation7], 4
      %s79 = int_to_ptr.vmem [resolvable:$true] %s78
      %84 = dma.hbm_to_vmem [thread:$0]  %s15, 1024, %s79, [#allocation8], 64, 64, 4
    $region65: #{tpu_custom_call.1} parent=1 // pred_fallthru
      _
    // Predicated region
    $region66: #{tpu_custom_call.1} parent=1 // pred_check
      _
    $region67: #{tpu_custom_call.1} parent=1 // pred_check_branch
      %86 = sbr.rel (0) target = $region69
    $region68: #{tpu_custom_call.1} parent=1 // pred_region
      _
    $region69: #{tpu_custom_call.1} parent=1 // pred_fallthru
      _
    // Predicated region
    $region70: #{tpu_custom_call.1} parent=1 // pred_check
      _
    $region71: #{tpu_custom_call.1} parent=1 // pred_check_branch
      %88 = sbr.rel (0) target = $region73
    $region72: #{tpu_custom_call.1} parent=1 // pred_region
      _
    $region73: #{tpu_custom_call.1} parent=1 // pred_fallthru
      _
    // Predicated region
    $region74: #{tpu_custom_call.1} parent=1 // pred_check
      _
    $region75: #{tpu_custom_call.1} parent=1 // pred_check_branch
      %90 = sbr.rel (0) target = $region77
    $region76: #{tpu_custom_call.1} parent=1 // pred_region
      %s92 = ssub.s32 1024, 1024
      %93 = vsyncadd [#allocation8], %s92
      %s94 = sshll.u32 [#allocation9], 4
      %s95 = int_to_ptr.vmem [resolvable:$true] %s94
      %100 = dma.hbm_to_vmem [thread:$0]  %s18, 1024, %s95, [#allocation8], 64, 64, 4
    $region77: #{tpu_custom_call.1} parent=1 // pred_fallthru
      _
    // Predicated region
    $region78: #{tpu_custom_call.1} parent=1 // pred_check
      _
    $region79: #{tpu_custom_call.1} parent=1 // pred_check_branch
      %102 = sbr.rel (0) target = $region81
    $region80: #{tpu_custom_call.1} parent=1 // pred_region
      _
    $region81: #{tpu_custom_call.1} parent=1 // pred_fallthru
      _
    // Predicated region
    $region82: #{tpu_custom_call.1} parent=1 // pred_check
      _
    $region83: #{tpu_custom_call.1} parent=1 // pred_check_branch
      %104 = sbr.rel (0) target = $region85
    $region84: #{tpu_custom_call.1} parent=1 // pred_region
      _
    $region85: #{tpu_custom_call.1} parent=1 // pred_fallthru
      _
    // Predicated region
    $region86: #{tpu_custom_call.1} parent=1 // pred_check
      _
    $region87: #{tpu_custom_call.1} parent=1 // pred_check_branch
      %106 = sbr.rel (0) target = $region89
    $region88: #{tpu_custom_call.1} parent=1 // pred_region
      _
    $region89: #{tpu_custom_call.1} parent=1 // pred_fallthru
      _
    // Predicated region
    $region90: #{tpu_custom_call.1} parent=1 // pred_check
      _
    $region91: #{tpu_custom_call.1} parent=1 // pred_check_branch
      %108 = sbr.rel (0) target = $region93
    $region92: #{tpu_custom_call.1} parent=1 // pred_region
      %s110 = ssub.s32 16, 16
      %111 = vsyncadd [#allocation6], %s110
      %s113 = sshll.u32 %s22, 4
      %s114 = int_to_ptr.vmem [resolvable:$true] %s113
      %116 = dma.vmem_to_smem %s114, 16, [#allocation10], [#allocation6]
    $region93: #{tpu_custom_call.1} parent=1 // pred_fallthru
      _
    // Predicated region
    $region94: #{tpu_custom_call.1} parent=1 // pred_check
      _
    $region95: #{tpu_custom_call.1} parent=1 // pred_check_branch
      %118 = sbr.rel (0) target = $region97
    $region96: #{tpu_custom_call.1} parent=1 // pred_region
      %119 = dma.done [#allocation4], 48
    $region97: #{tpu_custom_call.1} parent=1 // pred_fallthru
      _
    // Predicated region
    $region98: #{tpu_custom_call.1} parent=1 // pred_check
      _
    $region99: #{tpu_custom_call.1} parent=1 // pred_check_branch
      %121 = sbr.rel (0) target = $region101
    $region100: #{tpu_custom_call.1} parent=1 // pred_region
      %122 = dma.done [#allocation8], 1024
    $region101: #{tpu_custom_call.1} parent=1 // pred_fallthru
      _
    // Predicated region
    $region102: #{tpu_custom_call.1} parent=1 // pred_check
      _
    $region103: #{tpu_custom_call.1} parent=1 // pred_check_branch
      %124 = sbr.rel (0) target = $region105
    $region104: #{tpu_custom_call.1} parent=1 // pred_region
      %125 = dma.done [#allocation8], 1024
    $region105: #{tpu_custom_call.1} parent=1 // pred_fallthru
      _
    // Predicated region
    $region106: #{tpu_custom_call.1} parent=1 // pred_check
      _
    $region107: #{tpu_custom_call.1} parent=1 // pred_check_branch
      %127 = sbr.rel (0) target = $region109
    $region108: #{tpu_custom_call.1} parent=1 // pred_region
      %128 = dma.done [#allocation6], 16
    $region109: #{tpu_custom_call.1} parent=1 // pred_fallthru
      _
    %129 = sfence
    %v131 = vld [vmem:[%s0] sm:$0xff]
    %v132 = vld [vmem:[%s0 + $0x8] sm:$0xff]
    %v133 = vpack.c.bf16 %v132, %v131
    %v134 = vld [vmem:[%s6] sm:$0xf]
    %v135 = vld [vmem:[%s7] sm:$0x1]
    %v137 = vlaneseq
    %v138 = vshrl.u32 %v137, 7
    %v139 = vsub.s32 0, %v138
    %v140 = vrot.slane %v135, %v139
    %vm142 = vcmask 64512
    %v144 = vsel %vm142, %v133, 0
    %vm146 = vcmask 1043456
    %v148 = vsel %vm146, %v134, 0
    %150 = vmatprep.subr.bf16.mxu0 0
    %151 = vmatpush1.bf16.msra.mxu0 0
    %152 = vmatprep.subr.bf16.mxu0 0
    %153 = vmatpush1.bf16.msra.mxu0 0
    %154 = vmatprep.subr.bf16.mxu0 0
    %155 = vmatpush1.bf16.msra.mxu0 0
    %156 = vmatprep.subr.bf16.mxu0 0
    %157 = vmatpush1.bf16.msra.mxu0 0
    %158 = vmatprep.subr.bf16.mxu0 0
    %159 = vmatpush1.bf16.msra.mxu0 0
    %160 = vmatprep.subr.bf16.mxu0 0
    %161 = vmatpush1.bf16.msra.mxu0 0
    %162 = vmatprep.subr.bf16.mxu0 0
    %163 = vmatpush1.bf16.msra.mxu0 0
    %164 = vmatprep.subr.bf16.mxu0 0
    %165 = vmatpush1.bf16.msra.mxu0 %v148
    %166 = vmatprep.subr.bf16.mxu0 0
    %167 = vmatpush2.bf16.msra.mxu0 0
    %168 = vmatprep.subr.bf16.mxu0 0
    %169 = vmatpush2.bf16.msra.mxu0 0
    %170 = vmatprep.subr.bf16.mxu0 0
    %171 = vmatpush2.bf16.msra.mxu0 0
    %172 = vmatprep.subr.bf16.mxu0 0
    %173 = vmatpush2.bf16.msra.mxu0 0
    %174 = vmatprep.subr.bf16.mxu0 0
    %175 = vmatpush2.bf16.msra.mxu0 0
    %176 = vmatprep.subr.bf16.mxu0 0
    %177 = vmatpush2.bf16.msra.mxu0 0
    %178 = vmatprep.subr.bf16.mxu0 0
    %179 = vmatpush2.bf16.msra.mxu0 0
    %180 = vmatprep.subr.bf16.mxu0 0
    %181 = vmatpush2.bf16.msra.mxu0 0
    %182 = vmatprep.mubr.bf16.mxu0 0
    %183 = vmatmul.mubr.bf16.gmra.mxu0 %v144
    %v184 = vpop.f32.mrf.mxu0
    %v185 = vadd.f32 %v140, %v184
    %v186 = vpop.f32.mrf.mxu0
    %v187 = vpop.f32.mrf.mxu0
    %v188 = vadd.f32 %v140, %v187
    %v189 = vpop.f32.mrf.mxu0
    %190 = vdwg.mxu0
    %vm191 = vcmp.gt.f32.partialorder %v185, 0.0
    %vm192 = vcmp.gt.f32.partialorder %v188, 0.0
    %s193 = sld [smem:[#allocation2]]
    %v194 = vstv %s193
    %v195 = vmul.f32 %v194, %v185
    %v196 = vmul.f32 %v194, %v188
    %v197 = vsel %vm191, %v185, %v195
    %v198 = vsel %vm192, %v188, %v196
    %v199 = vld [vmem:[%s2] sm:$0xff]
    %v200 = vld [vmem:[%s2 + $0x8] sm:$0xff]
    %v201 = vld [vmem:[%s2 + $0x10] sm:$0xff]
    %v202 = vld [vmem:[%s2 + $0x18] sm:$0xff]
    %v203 = vld [vmem:[%s2 + $0x20] sm:$0xff]
    %v204 = vld [vmem:[%s2 + $0x28] sm:$0xff]
    %v205 = vld [vmem:[%s3] sm:$0xff]
    %v206 = vld [vmem:[%s3 + $0x8] sm:$0xff]
    %v207 = vld [vmem:[%s3 + $0x10] sm:$0xff]
    %v208 = vld [vmem:[%s3 + $0x18] sm:$0xff]
    %v209 = vld [vmem:[%s3 + $0x20] sm:$0xff]
    %v210 = vld [vmem:[%s3 + $0x28] sm:$0xff]
    %v211 = vlaneseq
    %v212 = vand.u32 %v211, 127
    %213 = vset.pattern.permute.xlu0 0
    %214 = vperm.xlu0 %213, %v199
    %v215 = vpop.permute.xlu0 %214
    %216 = vset.pattern.permute.xlu0 0
    %217 = vperm.xlu0 %216, %v200
    %v218 = vpop.permute.xlu0 %217
    %219 = vset.pattern.permute.xlu0 0
    %220 = vperm.xlu0 %219, %v201
    %v221 = vpop.permute.xlu0 %220
    %222 = vset.pattern.permute.xlu0 0
    %223 = vperm.xlu0 %222, %v202
    %v224 = vpop.permute.xlu0 %223
    %225 = vset.pattern.permute.xlu0 0
    %226 = vperm.xlu0 %225, %v203
    %v227 = vpop.permute.xlu0 %226
    %228 = vset.pattern.permute.xlu0 0
    %229 = vperm.xlu0 %228, %v204
    %v230 = vpop.permute.xlu0 %229
    %vm231 = vcmp.eq.s32.totalorder %v212, %v215
    %vm232 = vcmp.eq.s32.totalorder %v212, %v218
    %vm233 = vcmp.eq.s32.totalorder %v212, %v221
    %vm234 = vcmp.eq.s32.totalorder %v212, %v224
    %vm235 = vcmp.eq.s32.totalorder %v212, %v227
    %vm236 = vcmp.eq.s32.totalorder %v212, %v230
    %237 = vset.pattern.permute.xlu0 0
    %238 = vperm.xlu0 %237, %v205
    %v239 = vpop.permute.xlu0 %238
    %240 = vset.pattern.permute.xlu0 0
    %241 = vperm.xlu0 %240, %v206
    %v242 = vpop.permute.xlu0 %241
    %243 = vset.pattern.permute.xlu0 0
    %244 = vperm.xlu0 %243, %v207
    %v245 = vpop.permute.xlu0 %244
    %246 = vset.pattern.permute.xlu0 0
    %247 = vperm.xlu0 %246, %v208
    %v248 = vpop.permute.xlu0 %247
    %249 = vset.pattern.permute.xlu0 0
    %250 = vperm.xlu0 %249, %v209
    %v251 = vpop.permute.xlu0 %250
    %252 = vset.pattern.permute.xlu0 0
    %253 = vperm.xlu0 %252, %v210
    %v254 = vpop.permute.xlu0 %253
    %vm255 = vcmp.eq.s32.totalorder %v212, %v239
    %vm256 = vcmp.eq.s32.totalorder %v212, %v242
    %vm257 = vcmp.eq.s32.totalorder %v212, %v245
    %vm258 = vcmp.eq.s32.totalorder %v212, %v248
    %vm259 = vcmp.eq.s32.totalorder %v212, %v251
    %vm260 = vcmp.eq.s32.totalorder %v212, %v254
    %vm261 = vmor %vm231, %vm255
    %vm262 = vmor %vm232, %vm256
    %vm263 = vmor %vm233, %vm257
    %vm264 = vmor %vm234, %vm258
    %vm265 = vmor %vm235, %vm259
    %vm266 = vmor %vm236, %vm260
    %v267 = vsel %vm261, 1.0, 0.0
    %v268 = vsel %vm262, 1.0, 0.0
    %v269 = vsel %vm263, 1.0, 0.0
    %v270 = vsel %vm264, 1.0, 0.0
    %v271 = vsel %vm265, 1.0, 0.0
    %v272 = vsel %vm266, 1.0, 0.0
    %v273 = vpack.c.bf16 %v268, %v267
    %v274 = vpack.c.bf16 %v270, %v269
    %v275 = vpack.c.bf16 %v272, %v271
    %v276 = vlaneseq
    %v277 = vshrl.u32 %v276, 7
    %v278 = vadd.s32 %v277, 8
    %v279 = vld [vmem:[%s4] sm:$0x1]
    %v280 = vlaneseq
    %v281 = vshrl.u32 %v280, 7
    %v282 = vsub.s32 0, %v281
    %v283 = vrot.slane %v279, %v282
    %vm284 = vcmp.eq.s32.totalorder %v277, %v283
    %vm285 = vcmp.eq.s32.totalorder %v278, %v283
    %v286 = vsel %vm284, 1.0, 0.0
    %v287 = vsel %vm285, 1.0, 0.0
    %v288 = vpack.c.bf16 %v287, %v286
    %v289 = vld [vmem:[%s5] sm:$0xff]
    %v290 = vld [vmem:[%s5 + $0x8] sm:$0xff]
    %v291 = vld [vmem:[%s1] sm:$0xff]
    %v292 = vld [vmem:[%s1 + $0x8] sm:$0xff]
    %v293 = vld [vmem:[%s1 + $0x10] sm:$0xff]
    %v294 = vld [vmem:[%s1 + $0x18] sm:$0xff]
    %v295 = vld [vmem:[%s1 + $0x20] sm:$0xff]
    %v296 = vld [vmem:[%s1 + $0x28] sm:$0xff]
    %v297 = vpack.c.bf16 %v292, %v291
    %v298 = vpack.c.bf16 %v294, %v293
    %v299 = vpack.c.bf16 %v296, %v295
    %v300 = vld [vmem:[%s8] sm:$0x3f]
    %v301 = vld [vmem:[%s9] sm:$0x7]
    %v303 = vlaneseq
    %v304 = vshrl.u32 %v303, 7
    %v305 = vsub.s32 0, %v304
    %v306 = vrot.slane %v301, %v305
    %v307 = vlaneseq
    %v308 = vshrl.u32 %v307, 7
    %v309 = vsub.s32 1, %v308
    %v310 = vrot.slane %v301, %v309
    %v311 = vlaneseq
    %v312 = vshrl.u32 %v311, 7
    %v313 = vsub.s32 2, %v312
    %v314 = vrot.slane %v301, %v313
    %v319 = vcombine.high %v300, %v300
    %v321 = vunpack.c.l.s4 1983009808
    %v322 = vunpack.c.0.s8 %v321
    %v323 = vlaneseq
    %v324 = vshrl.u32 %v323, 7
    %v325 = vsub.s32 %v322, %v324
    %v326 = vrot.slane %v300, %v325
    %v328 = vunpack.c.l.s4 1983009808
    %v329 = vunpack.c.0.s8 %v328
    %v330 = vlaneseq
    %v331 = vshrl.u32 %v330, 7
    %v332 = vsub.s32 %v329, %v331
    %v333 = vrot.slane %v319, %v332
    %v334 = vcombine.high %v326, %v326
    %vm335 = vcmask 31744
    %v337 = vsel %vm335, %v297, 0
    %v340 = vsel %vm335, %v298, 0
    %v343 = vsel %vm335, %v299, 0
    %vm345 = vcmask 1041408
    %v347 = vsel %vm345, %v326, 0
    %v350 = vsel %vm345, %v334, 0
    %v353 = vsel %vm345, %v333, 0
    %355 = vmatprep.subr.bf16.mxu0 0
    %356 = vmatpush1.bf16.msra.mxu0 0
    %357 = vmatprep.subr.bf16.mxu0 0
    %358 = vmatpush1.bf16.msra.mxu0 0
    %359 = vmatprep.subr.bf16.mxu0 0
    %360 = vmatpush1.bf16.msra.mxu0 0
    %361 = vmatprep.subr.bf16.mxu0 0
    %362 = vmatpush1.bf16.msra.mxu0 0
    %363 = vmatprep.subr.bf16.mxu0 0
    %364 = vmatpush1.bf16.msra.mxu0 0
    %365 = vmatprep.subr.bf16.mxu0 0
    %366 = vmatpush1.bf16.msra.mxu0 0
    %367 = vmatprep.subr.bf16.mxu0 0
    %368 = vmatpush1.bf16.msra.mxu0 0
    %369 = vmatprep.subr.bf16.mxu0 %v350
    %370 = vmatpush1.bf16.msra.mxu0 %v347
    %371 = vmatprep.subr.bf16.mxu0 0
    %372 = vmatpush2.bf16.msra.mxu0 0
    %373 = vmatprep.subr.bf16.mxu0 0
    %374 = vmatpush2.bf16.msra.mxu0 0
    %375 = vmatprep.subr.bf16.mxu0 0
    %376 = vmatpush2.bf16.msra.mxu0 0
    %377 = vmatprep.subr.bf16.mxu0 0
    %378 = vmatpush2.bf16.msra.mxu0 0
    %379 = vmatprep.subr.bf16.mxu0 0
    %380 = vmatpush2.bf16.msra.mxu0 0
    %381 = vmatprep.subr.bf16.mxu0 0
    %382 = vmatpush2.bf16.msra.mxu0 0
    %383 = vmatprep.subr.bf16.mxu0 0
    %384 = vmatpush2.bf16.msra.mxu0 0
    %385 = vmatprep.subr.bf16.mxu0 0
    %386 = vmatpush2.bf16.msra.mxu0 0
    %387 = vmatprep.mubr.bf16.mxu0 0
    %388 = vmatmul.mubr.bf16.gmra.mxu0 %v337
    %v389 = vpop.f32.mrf.mxu0
    %v390 = vadd.f32 %v306, %v389
    %v391 = vpop.f32.mrf.mxu0
    %v392 = vadd.f32 %v310, %v391
    %v393 = vpop.f32.mrf.mxu0
    %v394 = vadd.f32 %v306, %v393
    %v395 = vpop.f32.mrf.mxu0
    %v396 = vadd.f32 %v310, %v395
    %397 = vmatprep.mubr.bf16.mxu0 0
    %398 = vmatmul.mubr.bf16.gmra.mxu0 %v340
    %v399 = vpop.f32.mrf.mxu0
    %v400 = vadd.f32 %v306, %v399
    %v401 = vpop.f32.mrf.mxu0
    %v402 = vadd.f32 %v310, %v401
    %v403 = vpop.f32.mrf.mxu0
    %v404 = vadd.f32 %v306, %v403
    %v405 = vpop.f32.mrf.mxu0
    %v406 = vadd.f32 %v310, %v405
    %407 = vmatprep.mubr.bf16.mxu0 0
    %408 = vmatmul.mubr.bf16.gmra.mxu0 %v343
    %v409 = vpop.f32.mrf.mxu0
    %v410 = vadd.f32 %v306, %v409
    %v411 = vpop.f32.mrf.mxu0
    %v412 = vadd.f32 %v310, %v411
    %v413 = vpop.f32.mrf.mxu0
    %v414 = vadd.f32 %v306, %v413
    %v415 = vpop.f32.mrf.mxu0
    %v416 = vadd.f32 %v310, %v415
    %417 = vdwg.mxu0
    %418 = vmatprep.subr.bf16.mxu0 0
    %419 = vmatpush1.bf16.msra.mxu0 0
    %420 = vmatprep.subr.bf16.mxu0 0
    %421 = vmatpush1.bf16.msra.mxu0 0
    %422 = vmatprep.subr.bf16.mxu0 0
    %423 = vmatpush1.bf16.msra.mxu0 0
    %424 = vmatprep.subr.bf16.mxu0 0
    %425 = vmatpush1.bf16.msra.mxu0 0
    %426 = vmatprep.subr.bf16.mxu0 0
    %427 = vmatpush1.bf16.msra.mxu0 0
    %428 = vmatprep.subr.bf16.mxu0 0
    %429 = vmatpush1.bf16.msra.mxu0 0
    %430 = vmatprep.subr.bf16.mxu0 0
    %431 = vmatpush1.bf16.msra.mxu0 0
    %432 = vmatprep.subr.bf16.mxu0 0
    %433 = vmatpush1.bf16.msra.mxu0 %v353
    %434 = vmatprep.subr.bf16.mxu0 0
    %435 = vmatpush2.bf16.msra.mxu0 0
    %436 = vmatprep.subr.bf16.mxu0 0
    %437 = vmatpush2.bf16.msra.mxu0 0
    %438 = vmatprep.subr.bf16.mxu0 0
    %439 = vmatpush2.bf16.msra.mxu0 0
    %440 = vmatprep.subr.bf16.mxu0 0
    %441 = vmatpush2.bf16.msra.mxu0 0
    %442 = vmatprep.subr.bf16.mxu0 0
    %443 = vmatpush2.bf16.msra.mxu0 0
    %444 = vmatprep.subr.bf16.mxu0 0
    %445 = vmatpush2.bf16.msra.mxu0 0
    %446 = vmatprep.subr.bf16.mxu0 0
    %447 = vmatpush2.bf16.msra.mxu0 0
    %448 = vmatprep.subr.bf16.mxu0 0
    %449 = vmatpush2.bf16.msra.mxu0 0
    %450 = vmatprep.mubr.bf16.mxu0 0
    %451 = vmatmul.mubr.bf16.gmra.mxu0 %v337
    %v452 = vpop.f32.mrf.mxu0
    %v453 = vadd.f32 %v314, %v452
    %v454 = vpop.f32.mrf.mxu0
    %v455 = vpop.f32.mrf.mxu0
    %v456 = vadd.f32 %v314, %v455
    %v457 = vpop.f32.mrf.mxu0
    %458 = vmatprep.mubr.bf16.mxu0 0
    %459 = vmatmul.mubr.bf16.gmra.mxu0 %v340
    %v460 = vpop.f32.mrf.mxu0
    %v461 = vadd.f32 %v314, %v460
    %v462 = vpop.f32.mrf.mxu0
    %v463 = vpop.f32.mrf.mxu0
    %v464 = vadd.f32 %v314, %v463
    %v465 = vpop.f32.mrf.mxu0
    %466 = vmatprep.mubr.bf16.mxu0 0
    %467 = vmatmul.mubr.bf16.gmra.mxu0 %v343
    %v468 = vpop.f32.mrf.mxu0
    %v469 = vadd.f32 %v314, %v468
    %v470 = vpop.f32.mrf.mxu0
    %v471 = vpop.f32.mrf.mxu0
    %v472 = vadd.f32 %v314, %v471
    %v473 = vpop.f32.mrf.mxu0
    %474 = vdwg.mxu0
    %vm475 = vcmp.gt.f32.partialorder %v390, 0.0
    %vm476 = vcmp.gt.f32.partialorder %v392, 0.0
    %vm477 = vcmp.gt.f32.partialorder %v453, 0.0
    %vm478 = vcmp.gt.f32.partialorder %v394, 0.0
    %vm479 = vcmp.gt.f32.partialorder %v396, 0.0
    %vm480 = vcmp.gt.f32.partialorder %v456, 0.0
    %vm481 = vcmp.gt.f32.partialorder %v400, 0.0
    %vm482 = vcmp.gt.f32.partialorder %v402, 0.0
    %vm483 = vcmp.gt.f32.partialorder %v461, 0.0
    %vm484 = vcmp.gt.f32.partialorder %v404, 0.0
    %vm485 = vcmp.gt.f32.partialorder %v406, 0.0
    %vm486 = vcmp.gt.f32.partialorder %v464, 0.0
    %vm487 = vcmp.gt.f32.partialorder %v410, 0.0
    %vm488 = vcmp.gt.f32.partialorder %v412, 0.0
    %vm489 = vcmp.gt.f32.partialorder %v469, 0.0
    %vm490 = vcmp.gt.f32.partialorder %v414, 0.0
    %vm491 = vcmp.gt.f32.partialorder %v416, 0.0
    %vm492 = vcmp.gt.f32.partialorder %v472, 0.0
    %v493 = vld [vmem:[%s10] sm:$0x7]
    %v495 = vlaneseq
    %v496 = vshrl.u32 %v495, 7
    %v497 = vsub.s32 0, %v496
    %v498 = vrot.slane %v493, %v497
    %v499 = vlaneseq
    %v500 = vshrl.u32 %v499, 7
    %v501 = vsub.s32 1, %v500
    %v502 = vrot.slane %v493, %v501
    %v503 = vlaneseq
    %v504 = vshrl.u32 %v503, 7
    %v505 = vsub.s32 2, %v504
    %v506 = vrot.slane %v493, %v505
    %v510 = vmul.f32 %v498, %v390
    %v511 = vmul.f32 %v502, %v392
    %v512 = vmul.f32 %v506, %v453
    %v513 = vmul.f32 %v498, %v394
    %v514 = vmul.f32 %v502, %v396
    %v515 = vmul.f32 %v506, %v456
    %v516 = vmul.f32 %v498, %v400
    %v517 = vmul.f32 %v502, %v402
    %v518 = vmul.f32 %v506, %v461
    %v519 = vmul.f32 %v498, %v404
    %v520 = vmul.f32 %v502, %v406
    %v521 = vmul.f32 %v506, %v464
    %v522 = vmul.f32 %v498, %v410
    %v523 = vmul.f32 %v502, %v412
    %v524 = vmul.f32 %v506, %v469
    %v525 = vmul.f32 %v498, %v414
    %v526 = vmul.f32 %v502, %v416
    %v527 = vmul.f32 %v506, %v472
    %v528 = vsel %vm475, %v390, %v510
    %v529 = vsel %vm476, %v392, %v511
    %v530 = vsel %vm477, %v453, %v512
    %v531 = vsel %vm478, %v394, %v513
    %v532 = vsel %vm479, %v396, %v514
    %v533 = vsel %vm480, %v456, %v515
    %v534 = vsel %vm481, %v400, %v516
    %v535 = vsel %vm482, %v402, %v517
    %v536 = vsel %vm483, %v461, %v518
    %v537 = vsel %vm484, %v404, %v519
    %v538 = vsel %vm485, %v406, %v520
    %v539 = vsel %vm486, %v464, %v521
    %v540 = vsel %vm487, %v410, %v522
    %v541 = vsel %vm488, %v412, %v523
    %v542 = vsel %vm489, %v469, %v524
    %v543 = vsel %vm490, %v414, %v525
    %v544 = vsel %vm491, %v416, %v526
    %v545 = vsel %vm492, %v472, %v527
    %546 = vrot.lane.b32.xlu0 %v197, 32
    %v547 = vpop.permute.xlu0 %546
    %548 = vrot.lane.b32.xlu0 %v198, 32
    %v549 = vpop.permute.xlu0 %548
    %v550 = vpack.c.bf16 %v198, %v197
    %v551 = vpack.c.bf16 %v549, %v547
    %vm552 = vcmask 261120
    %v554 = vsel %vm552, %v273, 0
    %v557 = vsel %vm552, %v274, 0
    %v560 = vsel %vm552, %v275, 0
    %562 = vmatprep.subr.bf16.mxu0 0
    %563 = vmatpush1.bf16.msra.mxu0 0
    %564 = vmatprep.subr.bf16.mxu0 0
    %565 = vmatpush1.bf16.msra.mxu0 0
    %566 = vmatprep.subr.bf16.mxu0 0
    %567 = vmatpush1.bf16.msra.mxu0 0
    %568 = vmatprep.subr.bf16.mxu0 0
    %569 = vmatpush1.bf16.msra.mxu0 0
    %570 = vmatprep.subr.bf16.mxu0 0
    %571 = vmatpush1.bf16.msra.mxu0 0
    %572 = vmatprep.subr.bf16.mxu0 0
    %573 = vmatpush1.bf16.msra.mxu0 0
    %574 = vmatprep.subr.bf16.mxu0 0
    %575 = vmatpush1.bf16.msra.mxu0 %v551
    %576 = vmatprep.subr.bf16.mxu0 0
    %577 = vmatpush1.bf16.msra.mxu0 %v550
    %578 = vmatprep.subr.bf16.mxu0 0
    %579 = vmatpush2.bf16.msra.mxu0 0
    %580 = vmatprep.subr.bf16.mxu0 0
    %581 = vmatpush2.bf16.msra.mxu0 0
    %582 = vmatprep.subr.bf16.mxu0 0
    %583 = vmatpush2.bf16.msra.mxu0 0
    %584 = vmatprep.subr.bf16.mxu0 0
    %585 = vmatpush2.bf16.msra.mxu0 0
    %586 = vmatprep.subr.bf16.mxu0 0
    %587 = vmatpush2.bf16.msra.mxu0 0
    %588 = vmatprep.subr.bf16.mxu0 0
    %589 = vmatpush2.bf16.msra.mxu0 0
    %590 = vmatprep.subr.bf16.mxu0 0
    %591 = vmatpush2.bf16.msra.mxu0 0
    %592 = vmatprep.subr.bf16.mxu0 0
    %593 = vmatpush2.bf16.msra.mxu0 0
    %594 = vmatprep.mubr.bf16.mxu0 0
    %595 = vmatmul.mubr.bf16.gmra.mxu0 %v554
    %v596 = vpop.f32.mrf.mxu0
    %v597 = vadd.f32 %v528, %v596
    %v598 = vpop.f32.mrf.mxu0
    %v599 = vpop.f32.mrf.mxu0
    %v600 = vadd.f32 %v531, %v599
    %v601 = vpop.f32.mrf.mxu0
    %602 = vmatprep.mubr.bf16.mxu0 0
    %603 = vmatmul.mubr.bf16.gmra.mxu0 %v557
    %v604 = vpop.f32.mrf.mxu0
    %v605 = vadd.f32 %v534, %v604
    %v606 = vpop.f32.mrf.mxu0
    %v607 = vpop.f32.mrf.mxu0
    %v608 = vadd.f32 %v537, %v607
    %v609 = vpop.f32.mrf.mxu0
    %610 = vmatprep.mubr.bf16.mxu0 0
    %611 = vmatmul.mubr.bf16.gmra.mxu0 %v560
    %v612 = vpop.f32.mrf.mxu0
    %v613 = vadd.f32 %v540, %v612
    %v614 = vpop.f32.mrf.mxu0
    %v615 = vpop.f32.mrf.mxu0
    %v616 = vadd.f32 %v543, %v615
    %v617 = vpop.f32.mrf.mxu0
    %618 = vdwg.mxu0
    %v619 = vpack.c.bf16 %v600, %v597
    %v620 = vpack.c.bf16 %v608, %v605
    %v621 = vpack.c.bf16 %v616, %v613
    %v622 = vld [vmem:[%s11] sm:$0xf]
    %v623 = vld [vmem:[%s11 + $0x4] sm:$0xf]
    %v624 = vld [vmem:[%s11 + $0x8] sm:$0xf]
    %v625 = vld [vmem:[%s11 + $0xc] sm:$0xf]
    %v626 = vld [vmem:[%s11 + $0x10] sm:$0xf]
    %v627 = vld [vmem:[%s11 + $0x14] sm:$0xf]
    %v628 = vld [vmem:[%s11 + $0x18] sm:$0xf]
    %v629 = vld [vmem:[%s11 + $0x1c] sm:$0xf]
    %v630 = vld [vmem:[%s11 + $0x20] sm:$0xf]
    %v631 = vld [vmem:[%s11 + $0x24] sm:$0xf]
    %v632 = vld [vmem:[%s11 + $0x28] sm:$0xf]
    %v633 = vld [vmem:[%s11 + $0x2c] sm:$0xf]
    %v634 = vld [vmem:[%s11 + $0x30] sm:$0xf]
    %v635 = vld [vmem:[%s11 + $0x34] sm:$0xf]
    %v636 = vld [vmem:[%s11 + $0x38] sm:$0xf]
    %v637 = vld [vmem:[%s11 + $0x3c] sm:$0xf]
    %v638 = vld [vmem:[%s12] sm:$0x1]
    %v640 = vlaneseq
    %v641 = vshrl.u32 %v640, 7
    %v642 = vsub.s32 0, %v641
    %v643 = vrot.slane %v638, %v642
    %v661 = vunpack.c.l.b16 %v622
    %v662 = vunpack.c.l.b16 %v623
    %v663 = vunpack.c.l.b16 %v624
    %v664 = vunpack.c.l.b16 %v625
    %v665 = vunpack.c.l.b16 %v626
    %v666 = vunpack.c.l.b16 %v627
    %v667 = vunpack.c.l.b16 %v628
    %v668 = vunpack.c.l.b16 %v629
    %v669 = vunpack.c.l.b16 %v630
    %v670 = vunpack.c.l.b16 %v631
    %v671 = vunpack.c.l.b16 %v632
    %v672 = vunpack.c.l.b16 %v633
    %v673 = vunpack.c.l.b16 %v634
    %v674 = vunpack.c.l.b16 %v635
    %v675 = vunpack.c.l.b16 %v636
    %v676 = vunpack.c.l.b16 %v637
    %v677 = vpack.c.b16 %v662, %v661
    %v678 = vpack.c.b16 %v664, %v663
    %v679 = vpack.c.b16 %v666, %v665
    %v680 = vpack.c.b16 %v668, %v667
    %v681 = vpack.c.b16 %v670, %v669
    %v682 = vpack.c.b16 %v672, %v671
    %v683 = vpack.c.b16 %v674, %v673
    %v684 = vpack.c.b16 %v676, %v675
    %693 = vmatprep.subr.bf16.mxu0 0
    %694 = vmatpush1.bf16.msra.mxu0 %v684
    %695 = vmatprep.subr.bf16.mxu0 0
    %696 = vmatpush1.bf16.msra.mxu0 %v683
    %697 = vmatprep.subr.bf16.mxu0 0
    %698 = vmatpush1.bf16.msra.mxu0 %v682
    %699 = vmatprep.subr.bf16.mxu0 0
    %700 = vmatpush1.bf16.msra.mxu0 %v681
    %701 = vmatprep.subr.bf16.mxu0 0
    %702 = vmatpush1.bf16.msra.mxu0 %v680
    %703 = vmatprep.subr.bf16.mxu0 0
    %704 = vmatpush1.bf16.msra.mxu0 %v679
    %705 = vmatprep.subr.bf16.mxu0 0
    %706 = vmatpush1.bf16.msra.mxu0 %v678
    %707 = vmatprep.subr.bf16.mxu0 0
    %708 = vmatpush1.bf16.msra.mxu0 %v677
    %709 = vmatprep.subr.bf16.mxu0 0
    %710 = vmatpush2.bf16.msra.mxu0 0
    %711 = vmatprep.subr.bf16.mxu0 0
    %712 = vmatpush2.bf16.msra.mxu0 0
    %713 = vmatprep.subr.bf16.mxu0 0
    %714 = vmatpush2.bf16.msra.mxu0 0
    %715 = vmatprep.subr.bf16.mxu0 0
    %716 = vmatpush2.bf16.msra.mxu0 0
    %717 = vmatprep.subr.bf16.mxu0 0
    %718 = vmatpush2.bf16.msra.mxu0 0
    %719 = vmatprep.subr.bf16.mxu0 0
    %720 = vmatpush2.bf16.msra.mxu0 0
    %721 = vmatprep.subr.bf16.mxu0 0
    %722 = vmatpush2.bf16.msra.mxu0 0
    %723 = vmatprep.subr.bf16.mxu0 0
    %724 = vmatpush2.bf16.msra.mxu0 0
    %725 = vmatprep.mubr.bf16.mxu0 0
    %726 = vmatmul.mubr.bf16.gmra.mxu0 %v619
    %v727 = vpop.f32.mrf.mxu0
    %v728 = vadd.f32 %v643, %v727
    %v729 = vpop.f32.mrf.mxu0
    %v730 = vpop.f32.mrf.mxu0
    %v731 = vadd.f32 %v643, %v730
    %v732 = vpop.f32.mrf.mxu0
    %733 = vmatprep.mubr.bf16.mxu0 0
    %734 = vmatmul.mubr.bf16.gmra.mxu0 %v620
    %v735 = vpop.f32.mrf.mxu0
    %v736 = vadd.f32 %v643, %v735
    %v737 = vpop.f32.mrf.mxu0
    %v738 = vpop.f32.mrf.mxu0
    %v739 = vadd.f32 %v643, %v738
    %v740 = vpop.f32.mrf.mxu0
    %741 = vmatprep.mubr.bf16.mxu0 0
    %742 = vmatmul.mubr.bf16.gmra.mxu0 %v621
    %v743 = vpop.f32.mrf.mxu0
    %v744 = vadd.f32 %v643, %v743
    %v745 = vpop.f32.mrf.mxu0
    %v746 = vpop.f32.mrf.mxu0
    %v747 = vadd.f32 %v643, %v746
    %v748 = vpop.f32.mrf.mxu0
    %749 = vdwg.mxu0
    %vm750 = vcmp.gt.f32.partialorder %v728, 0.0
    %vm751 = vcmp.gt.f32.partialorder %v731, 0.0
    %vm752 = vcmp.gt.f32.partialorder %v736, 0.0
    %vm753 = vcmp.gt.f32.partialorder %v739, 0.0
    %vm754 = vcmp.gt.f32.partialorder %v744, 0.0
    %vm755 = vcmp.gt.f32.partialorder %v747, 0.0
    %s756 = sld [smem:[#allocation10]]
    %v757 = vstv %s756
    %v758 = vmul.f32 %v757, %v728
    %v759 = vmul.f32 %v757, %v731
    %v760 = vmul.f32 %v757, %v736
    %v761 = vmul.f32 %v757, %v739
    %v762 = vmul.f32 %v757, %v744
    %v763 = vmul.f32 %v757, %v747
    %v764 = vsel %vm750, %v728, %v758
    %v765 = vsel %vm751, %v731, %v759
    %v766 = vsel %vm752, %v736, %v760
    %v767 = vsel %vm753, %v739, %v761
    %v768 = vsel %vm754, %v744, %v762
    %v769 = vsel %vm755, %v747, %v763
    %v770 = vpack.c.bf16 %v765, %v764
    %v771 = vpack.c.bf16 %v767, %v766
    %v772 = vpack.c.bf16 %v769, %v768
    %vm773 = vcmask 392192
    %v775 = vsel %vm773, %v288, 0
    %777 = vmatprep.subr.bf16.mxu0 0
    %778 = vmatpush1.bf16.msra.mxu0 0
    %779 = vmatprep.subr.bf16.mxu0 0
    %780 = vmatpush1.bf16.msra.mxu0 0
    %781 = vmatprep.subr.bf16.mxu0 0
    %782 = vmatpush1.bf16.msra.mxu0 0
    %783 = vmatprep.subr.bf16.mxu0 0
    %784 = vmatpush1.bf16.msra.mxu0 0
    %785 = vmatprep.subr.bf16.mxu0 0
    %786 = vmatpush1.bf16.msra.mxu0 0
    %787 = vmatprep.subr.bf16.mxu0 0
    %788 = vmatpush1.bf16.msra.mxu0 %v772
    %789 = vmatprep.subr.bf16.mxu0 0
    %790 = vmatpush1.bf16.msra.mxu0 %v771
    %791 = vmatprep.subr.bf16.mxu0 0
    %792 = vmatpush1.bf16.msra.mxu0 %v770
    %793 = vmatprep.subr.bf16.mxu0 0
    %794 = vmatpush2.bf16.msra.mxu0 0
    %795 = vmatprep.subr.bf16.mxu0 0
    %796 = vmatpush2.bf16.msra.mxu0 0
    %797 = vmatprep.subr.bf16.mxu0 0
    %798 = vmatpush2.bf16.msra.mxu0 0
    %799 = vmatprep.subr.bf16.mxu0 0
    %800 = vmatpush2.bf16.msra.mxu0 0
    %801 = vmatprep.subr.bf16.mxu0 0
    %802 = vmatpush2.bf16.msra.mxu0 0
    %803 = vmatprep.subr.bf16.mxu0 0
    %804 = vmatpush2.bf16.msra.mxu0 0
    %805 = vmatprep.subr.bf16.mxu0 0
    %806 = vmatpush2.bf16.msra.mxu0 0
    %807 = vmatprep.subr.bf16.mxu0 0
    %808 = vmatpush2.bf16.msra.mxu0 0
    %809 = vmatprep.mubr.bf16.mxu0 0
    %810 = vmatmul.mubr.bf16.gmra.mxu0 %v775
    %v811 = vpop.f32.mrf.mxu0
    %v812 = vadd.f32 0.0, %v811
    %v813 = vpop.f32.mrf.mxu0
    %v814 = vpop.f32.mrf.mxu0
    %v815 = vadd.f32 0.0, %v814
    %v816 = vpop.f32.mrf.mxu0
    %817 = vdwg.mxu0
    %819 = vset.pattern.permute.xlu0 0
    %820 = vperm.xlu0 %819, %v289
    %v821 = vpop.permute.xlu0 %820
    %824 = vset.pattern.permute.xlu0 0
    %825 = vperm.xlu0 %824, %v290
    %v826 = vpop.permute.xlu0 %825
    %v828 = vmul.f32 %v812, %v821
    %v829 = vmul.f32 %v815, %v826
    %v830 = vadd.f32 %v828, %v197
    %v831 = vadd.f32 %v829, %v198
    %v832 = vadd.f32 %v830, %v831
    %v833 = vrot.slane %v832, 4
    %v834 = vadd.f32 %v832, %v833
    %v835 = vrot.slane %v834, 2
    %v836 = vadd.f32 %v834, %v835
    %v837 = vrot.slane %v836, 1
    %v838 = vadd.f32 %v836, %v837
    %v839 = vrcp.pop 16.0
    %v840 = vmul.f32 %v838, %v839
    %v841 = vmul.f32 %v830, %v830
    %v842 = vmul.f32 %v831, %v831
    %v843 = vadd.f32 %v841, %v842
    %v844 = vrot.slane %v843, 4
    %v845 = vadd.f32 %v843, %v844
    %v846 = vrot.slane %v845, 2
    %v847 = vadd.f32 %v845, %v846
    %v848 = vrot.slane %v847, 1
    %v849 = vadd.f32 %v847, %v848
    %v850 = vmul.f32 %v849, %v839
    %v851 = vmul.f32 %v840, %v840
    %v852 = vsub.f32 %v850, %v851
    %v853 = vmax.f32 %v852, 0.0
    %v854 = vld [vmem:[%s13] sm:$0x1]
    %v855 = vsub.f32 %v830, %v840
    %v856 = vsub.f32 %v831, %v840
    %v857 = vadd.f32 %v853, 1e-05
    %v858 = vrsqrt.pop %v857
    %v859 = vmul.f32 %v855, %v858
    %v860 = vmul.f32 %v856, %v858
    %v862 = vlaneseq
    %v863 = vshrl.u32 %v862, 7
    %v864 = vsub.s32 0, %v863
    %v865 = vrot.slane %v854, %v864
    %v867 = vmul.f32 %v865, %v859
    %v868 = vmul.f32 %v865, %v860
    %v869 = vld [vmem:[#allocation3] sm:$0x1]
    %v871 = vlaneseq
    %v872 = vshrl.u32 %v871, 7
    %v873 = vsub.s32 0, %v872
    %v874 = vrot.slane %v869, %v873
    %v876 = vadd.f32 %v867, %v874
    %v877 = vadd.f32 %v868, %v874
    %878 = vrot.lane.b32.xlu0 %v876, 32
    %v879 = vpop.permute.xlu0 %878
    %880 = vrot.lane.b32.xlu0 %v877, 32
    %v881 = vpop.permute.xlu0 %880
    %v882 = vpack.c.bf16 %v877, %v876
    %v883 = vpack.c.bf16 %v881, %v879
    %884 = vmatprep.subr.bf16.mxu0 0
    %885 = vmatpush1.bf16.msra.mxu0 0
    %886 = vmatprep.subr.bf16.mxu0 0
    %887 = vmatpush1.bf16.msra.mxu0 0
    %888 = vmatprep.subr.bf16.mxu0 0
    %889 = vmatpush1.bf16.msra.mxu0 0
    %890 = vmatprep.subr.bf16.mxu0 0
    %891 = vmatpush1.bf16.msra.mxu0 0
    %892 = vmatprep.subr.bf16.mxu0 0
    %893 = vmatpush1.bf16.msra.mxu0 0
    %894 = vmatprep.subr.bf16.mxu0 0
    %895 = vmatpush1.bf16.msra.mxu0 0
    %896 = vmatprep.subr.bf16.mxu0 0
    %897 = vmatpush1.bf16.msra.mxu0 %v883
    %898 = vmatprep.subr.bf16.mxu0 0
    %899 = vmatpush1.bf16.msra.mxu0 %v882
    %900 = vmatprep.subr.bf16.mxu0 0
    %901 = vmatpush2.bf16.msra.mxu0 0
    %902 = vmatprep.subr.bf16.mxu0 0
    %903 = vmatpush2.bf16.msra.mxu0 0
    %904 = vmatprep.subr.bf16.mxu0 0
    %905 = vmatpush2.bf16.msra.mxu0 0
    %906 = vmatprep.subr.bf16.mxu0 0
    %907 = vmatpush2.bf16.msra.mxu0 0
    %908 = vmatprep.subr.bf16.mxu0 0
    %909 = vmatpush2.bf16.msra.mxu0 0
    %910 = vmatprep.subr.bf16.mxu0 0
    %911 = vmatpush2.bf16.msra.mxu0 0
    %912 = vmatprep.subr.bf16.mxu0 0
    %913 = vmatpush2.bf16.msra.mxu0 0
    %914 = vmatprep.subr.bf16.mxu0 0
    %915 = vmatpush2.bf16.msra.mxu0 0
    %916 = vmatprep.mubr.bf16.mxu0 0
    %917 = vmatmul.mubr.bf16.gmra.mxu0 %v554
    %v918 = vpop.f32.mrf.mxu0
    %v919 = vadd.f32 %v529, %v918
    %v920 = vpop.f32.mrf.mxu0
    %v921 = vpop.f32.mrf.mxu0
    %v922 = vadd.f32 %v532, %v921
    %v923 = vpop.f32.mrf.mxu0
    %924 = vmatprep.mubr.bf16.mxu0 0
    %925 = vmatmul.mubr.bf16.gmra.mxu0 %v557
    %v926 = vpop.f32.mrf.mxu0
    %v927 = vadd.f32 %v535, %v926
    %v928 = vpop.f32.mrf.mxu0
    %v929 = vpop.f32.mrf.mxu0
    %v930 = vadd.f32 %v538, %v929
    %v931 = vpop.f32.mrf.mxu0
    %932 = vmatprep.mubr.bf16.mxu0 0
    %933 = vmatmul.mubr.bf16.gmra.mxu0 %v560
    %v934 = vpop.f32.mrf.mxu0
    %v935 = vadd.f32 %v541, %v934
    %v936 = vpop.f32.mrf.mxu0
    %v937 = vpop.f32.mrf.mxu0
    %v938 = vadd.f32 %v544, %v937
    %v939 = vpop.f32.mrf.mxu0
    %940 = vdwg.mxu0
    %v941 = vpack.c.bf16 %v922, %v919
    %v942 = vpack.c.bf16 %v930, %v927
    %v943 = vpack.c.bf16 %v938, %v935
    %s944 = scalar_lea.vmem %s11, 64
    %v945 = vld [vmem:[%s944] sm:$0xf]
    %v946 = vld [vmem:[%s944 + $0x4] sm:$0xf]
    %v947 = vld [vmem:[%s944 + $0x8] sm:$0xf]
    %v948 = vld [vmem:[%s944 + $0xc] sm:$0xf]
    %v949 = vld [vmem:[%s944 + $0x10] sm:$0xf]
    %v950 = vld [vmem:[%s944 + $0x14] sm:$0xf]
    %v951 = vld [vmem:[%s944 + $0x18] sm:$0xf]
    %v952 = vld [vmem:[%s944 + $0x1c] sm:$0xf]
    %v953 = vld [vmem:[%s944 + $0x20] sm:$0xf]
    %v954 = vld [vmem:[%s944 + $0x24] sm:$0xf]
    %v955 = vld [vmem:[%s944 + $0x28] sm:$0xf]
    %v956 = vld [vmem:[%s944 + $0x2c] sm:$0xf]
    %v957 = vld [vmem:[%s944 + $0x30] sm:$0xf]
    %v958 = vld [vmem:[%s944 + $0x34] sm:$0xf]
    %v959 = vld [vmem:[%s944 + $0x38] sm:$0xf]
    %v960 = vld [vmem:[%s944 + $0x3c] sm:$0xf]
    %s961 = scalar_lea.vmem %s12, 1
    %v962 = vld [vmem:[%s961] sm:$0x1]
    %v964 = vlaneseq
    %v965 = vshrl.u32 %v964, 7
    %v966 = vsub.s32 0, %v965
    %v967 = vrot.slane %v962, %v966
    %v985 = vunpack.c.l.b16 %v945
    %v986 = vunpack.c.l.b16 %v946
    %v987 = vunpack.c.l.b16 %v947
    %v988 = vunpack.c.l.b16 %v948
    %v989 = vunpack.c.l.b16 %v949
    %v990 = vunpack.c.l.b16 %v950
    %v991 = vunpack.c.l.b16 %v951
    %v992 = vunpack.c.l.b16 %v952
    %v993 = vunpack.c.l.b16 %v953
    %v994 = vunpack.c.l.b16 %v954
    %v995 = vunpack.c.l.b16 %v955
    %v996 = vunpack.c.l.b16 %v956
    %v997 = vunpack.c.l.b16 %v957
    %v998 = vunpack.c.l.b16 %v958
    %v999 = vunpack.c.l.b16 %v959
    %v1000 = vunpack.c.l.b16 %v960
    %v1001 = vpack.c.b16 %v986, %v985
    %v1002 = vpack.c.b16 %v988, %v987
    %v1003 = vpack.c.b16 %v990, %v989
    %v1004 = vpack.c.b16 %v992, %v991
    %v1005 = vpack.c.b16 %v994, %v993
    %v1006 = vpack.c.b16 %v996, %v995
    %v1007 = vpack.c.b16 %v998, %v997
    %v1008 = vpack.c.b16 %v1000, %v999
    %1017 = vmatprep.subr.bf16.mxu0 0
    %1018 = vmatpush1.bf16.msra.mxu0 %v1008
    %1019 = vmatprep.subr.bf16.mxu0 0
    %1020 = vmatpush1.bf16.msra.mxu0 %v1007
    %1021 = vmatprep.subr.bf16.mxu0 0
    %1022 = vmatpush1.bf16.msra.mxu0 %v1006
    %1023 = vmatprep.subr.bf16.mxu0 0
    %1024 = vmatpush1.bf16.msra.mxu0 %v1005
    %1025 = vmatprep.subr.bf16.mxu0 0
    %1026 = vmatpush1.bf16.msra.mxu0 %v1004
    %1027 = vmatprep.subr.bf16.mxu0 0
    %1028 = vmatpush1.bf16.msra.mxu0 %v1003
    %1029 = vmatprep.subr.bf16.mxu0 0
    %1030 = vmatpush1.bf16.msra.mxu0 %v1002
    %1031 = vmatprep.subr.bf16.mxu0 0
    %1032 = vmatpush1.bf16.msra.mxu0 %v1001
    %1033 = vmatprep.subr.bf16.mxu0 0
    %1034 = vmatpush2.bf16.msra.mxu0 0
    %1035 = vmatprep.subr.bf16.mxu0 0
    %1036 = vmatpush2.bf16.msra.mxu0 0
    %1037 = vmatprep.subr.bf16.mxu0 0
    %1038 = vmatpush2.bf16.msra.mxu0 0
    %1039 = vmatprep.subr.bf16.mxu0 0
    %1040 = vmatpush2.bf16.msra.mxu0 0
    %1041 = vmatprep.subr.bf16.mxu0 0
    %1042 = vmatpush2.bf16.msra.mxu0 0
    %1043 = vmatprep.subr.bf16.mxu0 0
    %1044 = vmatpush2.bf16.msra.mxu0 0
    %1045 = vmatprep.subr.bf16.mxu0 0
    %1046 = vmatpush2.bf16.msra.mxu0 0
    %1047 = vmatprep.subr.bf16.mxu0 0
    %1048 = vmatpush2.bf16.msra.mxu0 0
    %1049 = vmatprep.mubr.bf16.mxu0 0
    %1050 = vmatmul.mubr.bf16.gmra.mxu0 %v941
    %v1051 = vpop.f32.mrf.mxu0
    %v1052 = vadd.f32 %v967, %v1051
    %v1053 = vpop.f32.mrf.mxu0
    %v1054 = vpop.f32.mrf.mxu0
    %v1055 = vadd.f32 %v967, %v1054
    %v1056 = vpop.f32.mrf.mxu0
    %1057 = vmatprep.mubr.bf16.mxu0 0
    %1058 = vmatmul.mubr.bf16.gmra.mxu0 %v942
    %v1059 = vpop.f32.mrf.mxu0
    %v1060 = vadd.f32 %v967, %v1059
    %v1061 = vpop.f32.mrf.mxu0
    %v1062 = vpop.f32.mrf.mxu0
    %v1063 = vadd.f32 %v967, %v1062
    %v1064 = vpop.f32.mrf.mxu0
    %1065 = vmatprep.mubr.bf16.mxu0 0
    %1066 = vmatmul.mubr.bf16.gmra.mxu0 %v943
    %v1067 = vpop.f32.mrf.mxu0
    %v1068 = vadd.f32 %v967, %v1067
    %v1069 = vpop.f32.mrf.mxu0
    %v1070 = vpop.f32.mrf.mxu0
    %v1071 = vadd.f32 %v967, %v1070
    %v1072 = vpop.f32.mrf.mxu0
    %1073 = vdwg.mxu0
    %vm1074 = vcmp.gt.f32.partialorder %v1052, 0.0
    %vm1075 = vcmp.gt.f32.partialorder %v1055, 0.0
    %vm1076 = vcmp.gt.f32.partialorder %v1060, 0.0
    %vm1077 = vcmp.gt.f32.partialorder %v1063, 0.0
    %vm1078 = vcmp.gt.f32.partialorder %v1068, 0.0
    %vm1079 = vcmp.gt.f32.partialorder %v1071, 0.0
    %s1080 = sld [smem:[#allocation10 + $0x1]]
    %v1081 = vstv %s1080
    %v1082 = vmul.f32 %v1081, %v1052
    %v1083 = vmul.f32 %v1081, %v1055
    %v1084 = vmul.f32 %v1081, %v1060
    %v1085 = vmul.f32 %v1081, %v1063
    %v1086 = vmul.f32 %v1081, %v1068
    %v1087 = vmul.f32 %v1081, %v1071
    %v1088 = vsel %vm1074, %v1052, %v1082
    %v1089 = vsel %vm1075, %v1055, %v1083
    %v1090 = vsel %vm1076, %v1060, %v1084
    %v1091 = vsel %vm1077, %v1063, %v1085
    %v1092 = vsel %vm1078, %v1068, %v1086
    %v1093 = vsel %vm1079, %v1071, %v1087
    %v1094 = vpack.c.bf16 %v1089, %v1088
    %v1095 = vpack.c.bf16 %v1091, %v1090
    %v1096 = vpack.c.bf16 %v1093, %v1092
    %1097 = vmatprep.subr.bf16.mxu0 0
    %1098 = vmatpush1.bf16.msra.mxu0 0
    %1099 = vmatprep.subr.bf16.mxu0 0
    %1100 = vmatpush1.bf16.msra.mxu0 0
    %1101 = vmatprep.subr.bf16.mxu0 0
    %1102 = vmatpush1.bf16.msra.mxu0 0
    %1103 = vmatprep.subr.bf16.mxu0 0
    %1104 = vmatpush1.bf16.msra.mxu0 0
    %1105 = vmatprep.subr.bf16.mxu0 0
    %1106 = vmatpush1.bf16.msra.mxu0 0
    %1107 = vmatprep.subr.bf16.mxu0 0
    %1108 = vmatpush1.bf16.msra.mxu0 %v1096
    %1109 = vmatprep.subr.bf16.mxu0 0
    %1110 = vmatpush1.bf16.msra.mxu0 %v1095
    %1111 = vmatprep.subr.bf16.mxu0 0
    %1112 = vmatpush1.bf16.msra.mxu0 %v1094
    %1113 = vmatprep.subr.bf16.mxu0 0
    %1114 = vmatpush2.bf16.msra.mxu0 0
    %1115 = vmatprep.subr.bf16.mxu0 0
    %1116 = vmatpush2.bf16.msra.mxu0 0
    %1117 = vmatprep.subr.bf16.mxu0 0
    %1118 = vmatpush2.bf16.msra.mxu0 0
    %1119 = vmatprep.subr.bf16.mxu0 0
    %1120 = vmatpush2.bf16.msra.mxu0 0
    %1121 = vmatprep.subr.bf16.mxu0 0
    %1122 = vmatpush2.bf16.msra.mxu0 0
    %1123 = vmatprep.subr.bf16.mxu0 0
    %1124 = vmatpush2.bf16.msra.mxu0 0
    %1125 = vmatprep.subr.bf16.mxu0 0
    %1126 = vmatpush2.bf16.msra.mxu0 0
    %1127 = vmatprep.subr.bf16.mxu0 0
    %1128 = vmatpush2.bf16.msra.mxu0 0
    %1129 = vmatprep.mubr.bf16.mxu0 0
    %1130 = vmatmul.mubr.bf16.gmra.mxu0 %v775
    %v1131 = vpop.f32.mrf.mxu0
    %v1132 = vadd.f32 0.0, %v1131
    %v1133 = vpop.f32.mrf.mxu0
    %v1134 = vpop.f32.mrf.mxu0
    %v1135 = vadd.f32 0.0, %v1134
    %v1136 = vpop.f32.mrf.mxu0
    %1137 = vdwg.mxu0
    %v1138 = vmul.f32 %v1132, %v821
    %v1139 = vmul.f32 %v1135, %v826
    %v1140 = vadd.f32 %v1138, %v876
    %v1141 = vadd.f32 %v1139, %v877
    %v1142 = vadd.f32 %v1140, %v1141
    %v1143 = vrot.slane %v1142, 4
    %v1144 = vadd.f32 %v1142, %v1143
    %v1145 = vrot.slane %v1144, 2
    %v1146 = vadd.f32 %v1144, %v1145
    %v1147 = vrot.slane %v1146, 1
    %v1148 = vadd.f32 %v1146, %v1147
    %v1149 = vmul.f32 %v1148, %v839
    %v1150 = vmul.f32 %v1140, %v1140
    %v1151 = vmul.f32 %v1141, %v1141
    %v1152 = vadd.f32 %v1150, %v1151
    %v1153 = vrot.slane %v1152, 4
    %v1154 = vadd.f32 %v1152, %v1153
    %v1155 = vrot.slane %v1154, 2
    %v1156 = vadd.f32 %v1154, %v1155
    %v1157 = vrot.slane %v1156, 1
    %v1158 = vadd.f32 %v1156, %v1157
    %v1159 = vmul.f32 %v1158, %v839
    %v1160 = vmul.f32 %v1149, %v1149
    %v1161 = vsub.f32 %v1159, %v1160
    %v1162 = vmax.f32 %v1161, 0.0
    %s1163 = scalar_lea.vmem %s13, 1
    %v1164 = vld [vmem:[%s1163] sm:$0x1]
    %v1165 = vsub.f32 %v1140, %v1149
    %v1166 = vsub.f32 %v1141, %v1149
    %v1167 = vadd.f32 %v1162, 1e-05
    %v1168 = vrsqrt.pop %v1167
    %v1169 = vmul.f32 %v1165, %v1168
    %v1170 = vmul.f32 %v1166, %v1168
    %v1172 = vlaneseq
    %v1173 = vshrl.u32 %v1172, 7
    %v1174 = vsub.s32 0, %v1173
    %v1175 = vrot.slane %v1164, %v1174
    %v1177 = vmul.f32 %v1175, %v1169
    %v1178 = vmul.f32 %v1175, %v1170
    %s1179 = scalar_lea.vmem [#allocation3], 1
    %v1180 = vld [vmem:[%s1179] sm:$0x1]
    %v1182 = vlaneseq
    %v1183 = vshrl.u32 %v1182, 7
    %v1184 = vsub.s32 0, %v1183
    %v1185 = vrot.slane %v1180, %v1184
    %v1187 = vadd.f32 %v1177, %v1185
    %v1188 = vadd.f32 %v1178, %v1185
    %1189 = vrot.lane.b32.xlu0 %v1187, 32
    %v1190 = vpop.permute.xlu0 %1189
    %1191 = vrot.lane.b32.xlu0 %v1188, 32
    %v1192 = vpop.permute.xlu0 %1191
    %v1193 = vpack.c.bf16 %v1188, %v1187
    %v1194 = vpack.c.bf16 %v1192, %v1190
    %1195 = vmatprep.subr.bf16.mxu0 0
    %1196 = vmatpush1.bf16.msra.mxu0 0
    %1197 = vmatprep.subr.bf16.mxu0 0
    %1198 = vmatpush1.bf16.msra.mxu0 0
    %1199 = vmatprep.subr.bf16.mxu0 0
    %1200 = vmatpush1.bf16.msra.mxu0 0
    %1201 = vmatprep.subr.bf16.mxu0 0
    %1202 = vmatpush1.bf16.msra.mxu0 0
    %1203 = vmatprep.subr.bf16.mxu0 0
    %1204 = vmatpush1.bf16.msra.mxu0 0
    %1205 = vmatprep.subr.bf16.mxu0 0
    %1206 = vmatpush1.bf16.msra.mxu0 0
    %1207 = vmatprep.subr.bf16.mxu0 0
    %1208 = vmatpush1.bf16.msra.mxu0 %v1194
    %1209 = vmatprep.subr.bf16.mxu0 0
    %1210 = vmatpush1.bf16.msra.mxu0 %v1193
    %1211 = vmatprep.subr.bf16.mxu0 0
    %1212 = vmatpush2.bf16.msra.mxu0 0
    %1213 = vmatprep.subr.bf16.mxu0 0
    %1214 = vmatpush2.bf16.msra.mxu0 0
    %1215 = vmatprep.subr.bf16.mxu0 0
    %1216 = vmatpush2.bf16.msra.mxu0 0
    %1217 = vmatprep.subr.bf16.mxu0 0
    %1218 = vmatpush2.bf16.msra.mxu0 0
    %1219 = vmatprep.subr.bf16.mxu0 0
    %1220 = vmatpush2.bf16.msra.mxu0 0
    %1221 = vmatprep.subr.bf16.mxu0 0
    %1222 = vmatpush2.bf16.msra.mxu0 0
    %1223 = vmatprep.subr.bf16.mxu0 0
    %1224 = vmatpush2.bf16.msra.mxu0 0
    %1225 = vmatprep.subr.bf16.mxu0 0
    %1226 = vmatpush2.bf16.msra.mxu0 0
    %1227 = vmatprep.mubr.bf16.mxu0 0
    %1228 = vmatmul.mubr.bf16.gmra.mxu0 %v554
    %v1229 = vpop.f32.mrf.mxu0
    %v1230 = vadd.f32 %v530, %v1229
    %v1231 = vpop.f32.mrf.mxu0
    %v1232 = vpop.f32.mrf.mxu0
    %v1233 = vadd.f32 %v533, %v1232
    %v1234 = vpop.f32.mrf.mxu0
    %1235 = vmatprep.mubr.bf16.mxu0 0
    %1236 = vmatmul.mubr.bf16.gmra.mxu0 %v557
    %v1237 = vpop.f32.mrf.mxu0
    %v1238 = vadd.f32 %v536, %v1237
    %v1239 = vpop.f32.mrf.mxu0
    %v1240 = vpop.f32.mrf.mxu0
    %v1241 = vadd.f32 %v539, %v1240
    %v1242 = vpop.f32.mrf.mxu0
    %1243 = vmatprep.mubr.bf16.mxu0 0
    %1244 = vmatmul.mubr.bf16.gmra.mxu0 %v560
    %v1245 = vpop.f32.mrf.mxu0
    %v1246 = vadd.f32 %v542, %v1245
    %v1247 = vpop.f32.mrf.mxu0
    %v1248 = vpop.f32.mrf.mxu0
    %v1249 = vadd.f32 %v545, %v1248
    %v1250 = vpop.f32.mrf.mxu0
    %1251 = vdwg.mxu0
    %v1252 = vpack.c.bf16 %v1233, %v1230
    %v1253 = vpack.c.bf16 %v1241, %v1238
    %v1254 = vpack.c.bf16 %v1249, %v1246
    %s1255 = scalar_lea.vmem %s11, 128
    %v1256 = vld [vmem:[%s1255] sm:$0xf]
    %v1257 = vld [vmem:[%s1255 + $0x4] sm:$0xf]
    %v1258 = vld [vmem:[%s1255 + $0x8] sm:$0xf]
    %v1259 = vld [vmem:[%s1255 + $0xc] sm:$0xf]
    %v1260 = vld [vmem:[%s1255 + $0x10] sm:$0xf]
    %v1261 = vld [vmem:[%s1255 + $0x14] sm:$0xf]
    %v1262 = vld [vmem:[%s1255 + $0x18] sm:$0xf]
    %v1263 = vld [vmem:[%s1255 + $0x1c] sm:$0xf]
    %v1264 = vld [vmem:[%s1255 + $0x20] sm:$0xf]
    %v1265 = vld [vmem:[%s1255 + $0x24] sm:$0xf]
    %v1266 = vld [vmem:[%s1255 + $0x28] sm:$0xf]
    %v1267 = vld [vmem:[%s1255 + $0x2c] sm:$0xf]
    %v1268 = vld [vmem:[%s1255 + $0x30] sm:$0xf]
    %v1269 = vld [vmem:[%s1255 + $0x34] sm:$0xf]
    %v1270 = vld [vmem:[%s1255 + $0x38] sm:$0xf]
    %v1271 = vld [vmem:[%s1255 + $0x3c] sm:$0xf]
    %s1272 = scalar_lea.vmem %s12, 2
    %v1273 = vld [vmem:[%s1272] sm:$0x1]
    %v1275 = vlaneseq
    %v1276 = vshrl.u32 %v1275, 7
    %v1277 = vsub.s32 0, %v1276
    %v1278 = vrot.slane %v1273, %v1277
    %v1296 = vunpack.c.l.b16 %v1256
    %v1297 = vunpack.c.l.b16 %v1257
    %v1298 = vunpack.c.l.b16 %v1258
    %v1299 = vunpack.c.l.b16 %v1259
    %v1300 = vunpack.c.l.b16 %v1260
    %v1301 = vunpack.c.l.b16 %v1261
    %v1302 = vunpack.c.l.b16 %v1262
    %v1303 = vunpack.c.l.b16 %v1263
    %v1304 = vunpack.c.l.b16 %v1264
    %v1305 = vunpack.c.l.b16 %v1265
    %v1306 = vunpack.c.l.b16 %v1266
    %v1307 = vunpack.c.l.b16 %v1267
    %v1308 = vunpack.c.l.b16 %v1268
    %v1309 = vunpack.c.l.b16 %v1269
    %v1310 = vunpack.c.l.b16 %v1270
    %v1311 = vunpack.c.l.b16 %v1271
    %v1312 = vpack.c.b16 %v1297, %v1296
    %v1313 = vpack.c.b16 %v1299, %v1298
    %v1314 = vpack.c.b16 %v1301, %v1300
    %v1315 = vpack.c.b16 %v1303, %v1302
    %v1316 = vpack.c.b16 %v1305, %v1304
    %v1317 = vpack.c.b16 %v1307, %v1306
    %v1318 = vpack.c.b16 %v1309, %v1308
    %v1319 = vpack.c.b16 %v1311, %v1310
    %1328 = vmatprep.subr.bf16.mxu0 0
    %1329 = vmatpush1.bf16.msra.mxu0 %v1319
    %1330 = vmatprep.subr.bf16.mxu0 0
    %1331 = vmatpush1.bf16.msra.mxu0 %v1318
    %1332 = vmatprep.subr.bf16.mxu0 0
    %1333 = vmatpush1.bf16.msra.mxu0 %v1317
    %1334 = vmatprep.subr.bf16.mxu0 0
    %1335 = vmatpush1.bf16.msra.mxu0 %v1316
    %1336 = vmatprep.subr.bf16.mxu0 0
    %1337 = vmatpush1.bf16.msra.mxu0 %v1315
    %1338 = vmatprep.subr.bf16.mxu0 0
    %1339 = vmatpush1.bf16.msra.mxu0 %v1314
    %1340 = vmatprep.subr.bf16.mxu0 0
    %1341 = vmatpush1.bf16.msra.mxu0 %v1313
    %1342 = vmatprep.subr.bf16.mxu0 0
    %1343 = vmatpush1.bf16.msra.mxu0 %v1312
    %1344 = vmatprep.subr.bf16.mxu0 0
    %1345 = vmatpush2.bf16.msra.mxu0 0
    %1346 = vmatprep.subr.bf16.mxu0 0
    %1347 = vmatpush2.bf16.msra.mxu0 0
    %1348 = vmatprep.subr.bf16.mxu0 0
    %1349 = vmatpush2.bf16.msra.mxu0 0
    %1350 = vmatprep.subr.bf16.mxu0 0
    %1351 = vmatpush2.bf16.msra.mxu0 0
    %1352 = vmatprep.subr.bf16.mxu0 0
    %1353 = vmatpush2.bf16.msra.mxu0 0
    %1354 = vmatprep.subr.bf16.mxu0 0
    %1355 = vmatpush2.bf16.msra.mxu0 0
    %1356 = vmatprep.subr.bf16.mxu0 0
    %1357 = vmatpush2.bf16.msra.mxu0 0
    %1358 = vmatprep.subr.bf16.mxu0 0
    %1359 = vmatpush2.bf16.msra.mxu0 0
    %1360 = vmatprep.mubr.bf16.mxu0 0
    %1361 = vmatmul.mubr.bf16.gmra.mxu0 %v1252
    %v1362 = vpop.f32.mrf.mxu0
    %v1363 = vadd.f32 %v1278, %v1362
    %v1364 = vpop.f32.mrf.mxu0
    %v1365 = vpop.f32.mrf.mxu0
    %v1366 = vadd.f32 %v1278, %v1365
    %v1367 = vpop.f32.mrf.mxu0
    %1368 = vmatprep.mubr.bf16.mxu0 0
    %1369 = vmatmul.mubr.bf16.gmra.mxu0 %v1253
    %v1370 = vpop.f32.mrf.mxu0
    %v1371 = vadd.f32 %v1278, %v1370
    %v1372 = vpop.f32.mrf.mxu0
    %v1373 = vpop.f32.mrf.mxu0
    %v1374 = vadd.f32 %v1278, %v1373
    %v1375 = vpop.f32.mrf.mxu0
    %1376 = vmatprep.mubr.bf16.mxu0 0
    %1377 = vmatmul.mubr.bf16.gmra.mxu0 %v1254
    %v1378 = vpop.f32.mrf.mxu0
    %v1379 = vadd.f32 %v1278, %v1378
    %v1380 = vpop.f32.mrf.mxu0
    %v1381 = vpop.f32.mrf.mxu0
    %v1382 = vadd.f32 %v1278, %v1381
    %v1383 = vpop.f32.mrf.mxu0
    %1384 = vdwg.mxu0
    %vm1385 = vcmp.gt.f32.partialorder %v1363, 0.0
    %vm1386 = vcmp.gt.f32.partialorder %v1366, 0.0
    %vm1387 = vcmp.gt.f32.partialorder %v1371, 0.0
    %vm1388 = vcmp.gt.f32.partialorder %v1374, 0.0
    %vm1389 = vcmp.gt.f32.partialorder %v1379, 0.0
    %vm1390 = vcmp.gt.f32.partialorder %v1382, 0.0
    %s1391 = sld [smem:[#allocation10 + $0x2]]
    %v1392 = vstv %s1391
    %v1393 = vmul.f32 %v1392, %v1363
    %v1394 = vmul.f32 %v1392, %v1366
    %v1395 = vmul.f32 %v1392, %v1371
    %v1396 = vmul.f32 %v1392, %v1374
    %v1397 = vmul.f32 %v1392, %v1379
    %v1398 = vmul.f32 %v1392, %v1382
    %v1399 = vsel %vm1385, %v1363, %v1393
    %v1400 = vsel %vm1386, %v1366, %v1394
    %v1401 = vsel %vm1387, %v1371, %v1395
    %v1402 = vsel %vm1388, %v1374, %v1396
    %v1403 = vsel %vm1389, %v1379, %v1397
    %v1404 = vsel %vm1390, %v1382, %v1398
    %v1405 = vpack.c.bf16 %v1400, %v1399
    %v1406 = vpack.c.bf16 %v1402, %v1401
    %v1407 = vpack.c.bf16 %v1404, %v1403
    %1408 = vmatprep.subr.bf16.mxu0 0
    %1409 = vmatpush1.bf16.msra.mxu0 0
    %1410 = vmatprep.subr.bf16.mxu0 0
    %1411 = vmatpush1.bf16.msra.mxu0 0
    %1412 = vmatprep.subr.bf16.mxu0 0
    %1413 = vmatpush1.bf16.msra.mxu0 0
    %1414 = vmatprep.subr.bf16.mxu0 0
    %1415 = vmatpush1.bf16.msra.mxu0 0
    %1416 = vmatprep.subr.bf16.mxu0 0
    %1417 = vmatpush1.bf16.msra.mxu0 0
    %1418 = vmatprep.subr.bf16.mxu0 0
    %1419 = vmatpush1.bf16.msra.mxu0 %v1407
    %1420 = vmatprep.subr.bf16.mxu0 0
    %1421 = vmatpush1.bf16.msra.mxu0 %v1406
    %1422 = vmatprep.subr.bf16.mxu0 0
    %1423 = vmatpush1.bf16.msra.mxu0 %v1405
    %1424 = vmatprep.subr.bf16.mxu0 0
    %1425 = vmatpush2.bf16.msra.mxu0 0
    %1426 = vmatprep.subr.bf16.mxu0 0
    %1427 = vmatpush2.bf16.msra.mxu0 0
    %1428 = vmatprep.subr.bf16.mxu0 0
    %1429 = vmatpush2.bf16.msra.mxu0 0
    %1430 = vmatprep.subr.bf16.mxu0 0
    %1431 = vmatpush2.bf16.msra.mxu0 0
    %1432 = vmatprep.subr.bf16.mxu0 0
    %1433 = vmatpush2.bf16.msra.mxu0 0
    %1434 = vmatprep.subr.bf16.mxu0 0
    %1435 = vmatpush2.bf16.msra.mxu0 0
    %1436 = vmatprep.subr.bf16.mxu0 0
    %1437 = vmatpush2.bf16.msra.mxu0 0
    %1438 = vmatprep.subr.bf16.mxu0 0
    %1439 = vmatpush2.bf16.msra.mxu0 0
    %1440 = vmatprep.mubr.bf16.mxu0 0
    %1441 = vmatmul.mubr.bf16.gmra.mxu0 %v775
    %v1442 = vpop.f32.mrf.mxu0
    %v1443 = vadd.f32 0.0, %v1442
    %v1444 = vpop.f32.mrf.mxu0
    %v1445 = vpop.f32.mrf.mxu0
    %v1446 = vadd.f32 0.0, %v1445
    %v1447 = vpop.f32.mrf.mxu0
    %1448 = vdwg.mxu0
    %v1449 = vmul.f32 %v1443, %v821
    %v1450 = vmul.f32 %v1446, %v826
    %v1451 = vadd.f32 %v1449, %v1187
    %v1452 = vadd.f32 %v1450, %v1188
    %v1453 = vadd.f32 %v1451, %v1452
    %v1454 = vrot.slane %v1453, 4
    %v1455 = vadd.f32 %v1453, %v1454
    %v1456 = vrot.slane %v1455, 2
    %v1457 = vadd.f32 %v1455, %v1456
    %v1458 = vrot.slane %v1457, 1
    %v1459 = vadd.f32 %v1457, %v1458
    %v1460 = vmul.f32 %v1459, %v839
    %v1461 = vmul.f32 %v1451, %v1451
    %v1462 = vmul.f32 %v1452, %v1452
    %v1463 = vadd.f32 %v1461, %v1462
    %v1464 = vrot.slane %v1463, 4
    %v1465 = vadd.f32 %v1463, %v1464
    %v1466 = vrot.slane %v1465, 2
    %v1467 = vadd.f32 %v1465, %v1466
    %v1468 = vrot.slane %v1467, 1
    %v1469 = vadd.f32 %v1467, %v1468
    %v1470 = vmul.f32 %v1469, %v839
    %v1471 = vmul.f32 %v1460, %v1460
    %v1472 = vsub.f32 %v1470, %v1471
    %v1473 = vmax.f32 %v1472, 0.0
    %s1474 = scalar_lea.vmem %s13, 2
    %v1475 = vld [vmem:[%s1474] sm:$0x1]
    %v1476 = vsub.f32 %v1451, %v1460
    %v1477 = vsub.f32 %v1452, %v1460
    %v1478 = vadd.f32 %v1473, 1e-05
    %v1479 = vrsqrt.pop %v1478
    %v1480 = vmul.f32 %v1476, %v1479
    %v1481 = vmul.f32 %v1477, %v1479
    %v1483 = vlaneseq
    %v1484 = vshrl.u32 %v1483, 7
    %v1485 = vsub.s32 0, %v1484
    %v1486 = vrot.slane %v1475, %v1485
    %v1488 = vmul.f32 %v1486, %v1480
    %v1489 = vmul.f32 %v1486, %v1481
    %s1490 = scalar_lea.vmem [#allocation3], 2
    %v1491 = vld [vmem:[%s1490] sm:$0x1]
    %v1493 = vlaneseq
    %v1494 = vshrl.u32 %v1493, 7
    %v1495 = vsub.s32 0, %v1494
    %v1496 = vrot.slane %v1491, %v1495
    %v1498 = vadd.f32 %v1488, %v1496
    %v1499 = vadd.f32 %v1489, %v1496
    %v1500 = vpack.c.bf16 %v1499, %v1498
    %v1501 = vld [vmem:[#allocation7] sm:$0xf]
    %v1502 = vld [vmem:[#allocation7 + $0x4] sm:$0xf]
    %v1503 = vld [vmem:[#allocation7 + $0x8] sm:$0xf]
    %v1504 = vld [vmem:[#allocation7 + $0xc] sm:$0xf]
    %v1505 = vld [vmem:[#allocation7 + $0x10] sm:$0xf]
    %v1506 = vld [vmem:[#allocation7 + $0x14] sm:$0xf]
    %v1507 = vld [vmem:[#allocation7 + $0x18] sm:$0xf]
    %v1508 = vld [vmem:[#allocation7 + $0x1c] sm:$0xf]
    %v1509 = vld [vmem:[#allocation7 + $0x20] sm:$0xf]
    %v1510 = vld [vmem:[#allocation7 + $0x24] sm:$0xf]
    %v1511 = vld [vmem:[#allocation7 + $0x28] sm:$0xf]
    %v1512 = vld [vmem:[#allocation7 + $0x2c] sm:$0xf]
    %v1513 = vld [vmem:[#allocation7 + $0x30] sm:$0xf]
    %v1514 = vld [vmem:[#allocation7 + $0x34] sm:$0xf]
    %v1515 = vld [vmem:[#allocation7 + $0x38] sm:$0xf]
    %v1516 = vld [vmem:[#allocation7 + $0x3c] sm:$0xf]
    %v1517 = vld [vmem:[%s16] sm:$0x1]
    %v1519 = vlaneseq
    %v1520 = vshrl.u32 %v1519, 7
    %v1521 = vsub.s32 0, %v1520
    %v1522 = vrot.slane %v1517, %v1521
    %v1540 = vunpack.c.l.b16 %v1501
    %v1541 = vunpack.c.l.b16 %v1502
    %v1542 = vunpack.c.l.b16 %v1503
    %v1543 = vunpack.c.l.b16 %v1504
    %v1544 = vunpack.c.l.b16 %v1505
    %v1545 = vunpack.c.l.b16 %v1506
    %v1546 = vunpack.c.l.b16 %v1507
    %v1547 = vunpack.c.l.b16 %v1508
    %v1548 = vunpack.c.l.b16 %v1509
    %v1549 = vunpack.c.l.b16 %v1510
    %v1550 = vunpack.c.l.b16 %v1511
    %v1551 = vunpack.c.l.b16 %v1512
    %v1552 = vunpack.c.l.b16 %v1513
    %v1553 = vunpack.c.l.b16 %v1514
    %v1554 = vunpack.c.l.b16 %v1515
    %v1555 = vunpack.c.l.b16 %v1516
    %v1556 = vpack.c.b16 %v1541, %v1540
    %v1557 = vpack.c.b16 %v1543, %v1542
    %v1558 = vpack.c.b16 %v1545, %v1544
    %v1559 = vpack.c.b16 %v1547, %v1546
    %v1560 = vpack.c.b16 %v1549, %v1548
    %v1561 = vpack.c.b16 %v1551, %v1550
    %v1562 = vpack.c.b16 %v1553, %v1552
    %v1563 = vpack.c.b16 %v1555, %v1554
    %1572 = vmatprep.subr.bf16.mxu0 0
    %1573 = vmatpush1.bf16.msra.mxu0 %v1563
    %1574 = vmatprep.subr.bf16.mxu0 0
    %1575 = vmatpush1.bf16.msra.mxu0 %v1562
    %1576 = vmatprep.subr.bf16.mxu0 0
    %1577 = vmatpush1.bf16.msra.mxu0 %v1561
    %1578 = vmatprep.subr.bf16.mxu0 0
    %1579 = vmatpush1.bf16.msra.mxu0 %v1560
    %1580 = vmatprep.subr.bf16.mxu0 0
    %1581 = vmatpush1.bf16.msra.mxu0 %v1559
    %1582 = vmatprep.subr.bf16.mxu0 0
    %1583 = vmatpush1.bf16.msra.mxu0 %v1558
    %1584 = vmatprep.subr.bf16.mxu0 0
    %1585 = vmatpush1.bf16.msra.mxu0 %v1557
    %1586 = vmatprep.subr.bf16.mxu0 0
    %1587 = vmatpush1.bf16.msra.mxu0 %v1556
    %1588 = vmatprep.subr.bf16.mxu0 0
    %1589 = vmatpush2.bf16.msra.mxu0 0
    %1590 = vmatprep.subr.bf16.mxu0 0
    %1591 = vmatpush2.bf16.msra.mxu0 0
    %1592 = vmatprep.subr.bf16.mxu0 0
    %1593 = vmatpush2.bf16.msra.mxu0 0
    %1594 = vmatprep.subr.bf16.mxu0 0
    %1595 = vmatpush2.bf16.msra.mxu0 0
    %1596 = vmatprep.subr.bf16.mxu0 0
    %1597 = vmatpush2.bf16.msra.mxu0 0
    %1598 = vmatprep.subr.bf16.mxu0 0
    %1599 = vmatpush2.bf16.msra.mxu0 0
    %1600 = vmatprep.subr.bf16.mxu0 0
    %1601 = vmatpush2.bf16.msra.mxu0 0
    %1602 = vmatprep.subr.bf16.mxu0 0
    %1603 = vmatpush2.bf16.msra.mxu0 0
    %1604 = vmatprep.mubr.bf16.mxu0 0
    %1605 = vmatmul.mubr.bf16.gmra.mxu0 %v1500
    %v1606 = vpop.f32.mrf.mxu0
    %v1607 = vadd.f32 %v1522, %v1606
    %v1608 = vpop.f32.mrf.mxu0
    %v1609 = vpop.f32.mrf.mxu0
    %v1610 = vadd.f32 %v1522, %v1609
    %v1611 = vpop.f32.mrf.mxu0
    %1612 = vdwg.mxu0
    %vm1613 = vcmp.gt.f32.partialorder %v1607, 0.0
    %vm1614 = vcmp.gt.f32.partialorder %v1610, 0.0
    %v1615 = vld [vmem:[%s17] sm:$0x1]
    %v1617 = vlaneseq
    %v1618 = vshrl.u32 %v1617, 7
    %v1619 = vsub.s32 0, %v1618
    %v1620 = vrot.slane %v1615, %v1619
    %v1622 = vmul.f32 %v1620, %v1607
    %v1623 = vmul.f32 %v1620, %v1610
    %v1624 = vsel %vm1613, %v1607, %v1622
    %v1625 = vsel %vm1614, %v1610, %v1623
    %v1626 = vpack.c.bf16 %v1625, %v1624
    %v1627 = vld [vmem:[#allocation9] sm:$0xf]
    %v1628 = vld [vmem:[#allocation9 + $0x4] sm:$0xf]
    %v1629 = vld [vmem:[#allocation9 + $0x8] sm:$0xf]
    %v1630 = vld [vmem:[#allocation9 + $0xc] sm:$0xf]
    %v1631 = vld [vmem:[#allocation9 + $0x10] sm:$0xf]
    %v1632 = vld [vmem:[#allocation9 + $0x14] sm:$0xf]
    %v1633 = vld [vmem:[#allocation9 + $0x18] sm:$0xf]
    %v1634 = vld [vmem:[#allocation9 + $0x1c] sm:$0xf]
    %v1635 = vld [vmem:[#allocation9 + $0x20] sm:$0xf]
    %v1636 = vld [vmem:[#allocation9 + $0x24] sm:$0xf]
    %v1637 = vld [vmem:[#allocation9 + $0x28] sm:$0xf]
    %v1638 = vld [vmem:[#allocation9 + $0x2c] sm:$0xf]
    %v1639 = vld [vmem:[#allocation9 + $0x30] sm:$0xf]
    %v1640 = vld [vmem:[#allocation9 + $0x34] sm:$0xf]
    %v1641 = vld [vmem:[#allocation9 + $0x38] sm:$0xf]
    %v1642 = vld [vmem:[#allocation9 + $0x3c] sm:$0xf]
    %v1643 = vld [vmem:[%s19] sm:$0x1]
    %v1645 = vlaneseq
    %v1646 = vshrl.u32 %v1645, 7
    %v1647 = vsub.s32 0, %v1646
    %v1648 = vrot.slane %v1643, %v1647
    %v1666 = vunpack.c.l.b16 %v1627
    %v1667 = vunpack.c.l.b16 %v1628
    %v1668 = vunpack.c.l.b16 %v1629
    %v1669 = vunpack.c.l.b16 %v1630
    %v1670 = vunpack.c.l.b16 %v1631
    %v1671 = vunpack.c.l.b16 %v1632
    %v1672 = vunpack.c.l.b16 %v1633
    %v1673 = vunpack.c.l.b16 %v1634
    %v1674 = vunpack.c.l.b16 %v1635
    %v1675 = vunpack.c.l.b16 %v1636
    %v1676 = vunpack.c.l.b16 %v1637
    %v1677 = vunpack.c.l.b16 %v1638
    %v1678 = vunpack.c.l.b16 %v1639
    %v1679 = vunpack.c.l.b16 %v1640
    %v1680 = vunpack.c.l.b16 %v1641
    %v1681 = vunpack.c.l.b16 %v1642
    %v1682 = vpack.c.b16 %v1667, %v1666
    %v1683 = vpack.c.b16 %v1669, %v1668
    %v1684 = vpack.c.b16 %v1671, %v1670
    %v1685 = vpack.c.b16 %v1673, %v1672
    %v1686 = vpack.c.b16 %v1675, %v1674
    %v1687 = vpack.c.b16 %v1677, %v1676
    %v1688 = vpack.c.b16 %v1679, %v1678
    %v1689 = vpack.c.b16 %v1681, %v1680
    %1698 = vmatprep.subr.bf16.mxu0 0
    %1699 = vmatpush1.bf16.msra.mxu0 %v1689
    %1700 = vmatprep.subr.bf16.mxu0 0
    %1701 = vmatpush1.bf16.msra.mxu0 %v1688
    %1702 = vmatprep.subr.bf16.mxu0 0
    %1703 = vmatpush1.bf16.msra.mxu0 %v1687
    %1704 = vmatprep.subr.bf16.mxu0 0
    %1705 = vmatpush1.bf16.msra.mxu0 %v1686
    %1706 = vmatprep.subr.bf16.mxu0 0
    %1707 = vmatpush1.bf16.msra.mxu0 %v1685
    %1708 = vmatprep.subr.bf16.mxu0 0
    %1709 = vmatpush1.bf16.msra.mxu0 %v1684
    %1710 = vmatprep.subr.bf16.mxu0 0
    %1711 = vmatpush1.bf16.msra.mxu0 %v1683
    %1712 = vmatprep.subr.bf16.mxu0 0
    %1713 = vmatpush1.bf16.msra.mxu0 %v1682
    %1714 = vmatprep.subr.bf16.mxu0 0
    %1715 = vmatpush2.bf16.msra.mxu0 0
    %1716 = vmatprep.subr.bf16.mxu0 0
    %1717 = vmatpush2.bf16.msra.mxu0 0
    %1718 = vmatprep.subr.bf16.mxu0 0
    %1719 = vmatpush2.bf16.msra.mxu0 0
    %1720 = vmatprep.subr.bf16.mxu0 0
    %1721 = vmatpush2.bf16.msra.mxu0 0
    %1722 = vmatprep.subr.bf16.mxu0 0
    %1723 = vmatpush2.bf16.msra.mxu0 0
    %1724 = vmatprep.subr.bf16.mxu0 0
    %1725 = vmatpush2.bf16.msra.mxu0 0
    %1726 = vmatprep.subr.bf16.mxu0 0
    %1727 = vmatpush2.bf16.msra.mxu0 0
    %1728 = vmatprep.subr.bf16.mxu0 0
    %1729 = vmatpush2.bf16.msra.mxu0 0
    %1730 = vmatprep.mubr.bf16.mxu0 0
    %1731 = vmatmul.mubr.bf16.gmra.mxu0 %v1626
    %v1732 = vpop.f32.mrf.mxu0
    %v1733 = vadd.f32 %v1648, %v1732
    %v1734 = vpop.f32.mrf.mxu0
    %v1735 = vpop.f32.mrf.mxu0
    %v1736 = vadd.f32 %v1648, %v1735
    %v1737 = vpop.f32.mrf.mxu0
    %1738 = vdwg.mxu0
    %vm1739 = vcmp.gt.f32.partialorder %v1733, 0.0
    %vm1740 = vcmp.gt.f32.partialorder %v1736, 0.0
    %v1741 = vld [vmem:[%s20] sm:$0x1]
    %v1743 = vlaneseq
    %v1744 = vshrl.u32 %v1743, 7
    %v1745 = vsub.s32 0, %v1744
    %v1746 = vrot.slane %v1741, %v1745
    %v1748 = vmul.f32 %v1746, %v1733
    %v1749 = vmul.f32 %v1746, %v1736
    %v1750 = vsel %vm1739, %v1733, %v1748
    %v1751 = vsel %vm1740, %v1736, %v1749
    %1752 = vst [vmem:[#allocation11] sm:$0xff] %v1750
    %1753 = vst [vmem:[#allocation11 + $0x8] sm:$0xff] %v1751
    // Predicated region
    $region110: #{tpu_custom_call.1} parent=1 // pred_check
      _
    $region111: #{tpu_custom_call.1} parent=1 // pred_check_branch
      %1755 = sbr.rel (0) target = $region113
    $region112: #{tpu_custom_call.1} parent=1 // pred_region
      %s1757 = ssub.s32 256, 256
      %1758 = vsyncadd [#allocation5], %s1757
      %s1759 = sshll.u32 [#allocation11], 4
      %s1760 = int_to_ptr.vmem [resolvable:$true] %s1759
      %1765 = dma.vmem_to_hbm [thread:$0]  %s1760, 256, %s23, [#allocation5], 128, 128, 8
    $region113: #{tpu_custom_call.1} parent=1 // pred_fallthru
      _
    // Predicated region
    $region114: #{tpu_custom_call.1} parent=1 // pred_check
      _
    $region115: #{tpu_custom_call.1} parent=1 // pred_check_branch
      %1767 = sbr.rel (0) target = $region117
    $region116: #{tpu_custom_call.1} parent=1 // pred_region
      %1768 = dma.done [#allocation5], 256
    $region117: #{tpu_custom_call.1} parent=1 // pred_fallthru
      _
    %1769 = vsyncpa [#allocation4], 1
    %1770 = vsyncpa [#allocation8], 1
    %1771 = vsyncpa [#allocation5], 1
    %1772 = vsyncpa [#allocation6], 1

</llo_original>
